<compile_context>
chip_gen: v6e
topology: v6e:2x2x1
jax: 0.10.0
libtpu: 0.0.40
codegen_flags: <defaults>
</compile_context>

<pallas_src>
import jax
import jax.numpy as jnp
from jax import lax
from jax.experimental import pallas as pl
from jax.experimental.pallas import tpu as pltpu

LN_EPS = 1e-5
PADL = 128          # lane halo on each side of the flattened activation
CONV_DTYPE = jnp.bfloat16   # MXU operand dtype (f32 accumulation); set to
                            # jnp.float32 for strict f32 matmuls.


# ----------------------------------------------------------------------------
# Fused kernel factory
# ----------------------------------------------------------------------------
def _make_fused_kernel(C_in, C_out, H, W, K, conv_dtype):
    HW = H * W
    pad = K // 2
    Cg = ((C_in + 7) // 8) * 8          # sublane-aligned channel group
    R = K * K * Cg                      # patch-matrix contraction dim
    offs = [(ky, kx) for ky in range(K) for kx in range(K)]
    inv_H = 1.0 / float(H)
    assert pad * W + pad <= PADL, "halo too small for this kernel size"
    assert (H & (H - 1)) == 0, "n_features must be a power of two (roll-tree LN)"

    def kernel(x_ref, g1_ref, b1_ref, w1_ref, c1_ref,
               g2_ref, b2_ref, w2_ref, c2_ref,
               o_ref, padbuf_ref, patch_ref):
        f32 = jnp.float32

        # Column-validity masks for horizontal taps (dx != 0); built once,
        # reused by both convolutions.
        xpos = lax.broadcasted_iota(jnp.int32, (C_in, HW), 1) % W
        col_mask = {
            dx: ((xpos + dx >= 0) & (xpos + dx < W)).astype(f32)
            for dx in range(-pad, pad + 1) if dx != 0
        }

        def group_sum(v):
            # v: (C, HW) f32. Sum over the LayerNorm axis h (stride-W groups
            # of the flattened lane dim), broadcast back to every h.
            # Circular roll-tree -> direction-independent full-group sum.
            s = v
            step = W
            while step < HW:
                s = s + pltpu.roll(s, shift=step, axis=1)
                step *= 2
            return s

        def layer_norm_relu(a, g_ref, b_ref):
            # a: (C, HW) f32; LayerNorm over h, affine, then ReLU (f32 VPU).
            mean = group_sum(a) * inv_H
            d = a - mean
            var = group_sum(d * d) * inv_H          # biased, like torch
            y = d * lax.rsqrt(var + LN_EPS) * g_ref[...] + b_ref[...]
            return jnp.maximum(y, 0.0)

        def conv_same(a, w_ref, bias_ref):
            # a: (C_in, HW) f32 -> (C_out, HW) f32.  'same' padding via the
            # zero halo around the flattened activation in padbuf_ref.
            padbuf_ref[:, PADL:PADL + HW] = a       # lane-aligned interior
            for t, (ky, kx) in enumerate(offs):
                dy, dx = ky - pad, kx - pad
                start = PADL + dy * W + dx
                sl = padbuf_ref[:, start:start + HW]          # shifted window
                if dx != 0:
                    sl = sl * col_mask[dx]                    # kill row wrap
                patch_ref[t * Cg:t * Cg + C_in, :] = sl.astype(conv_dtype)
            # One MXU matmul: (C_out, R) @ (R, HW), f32 accumulation.
            out = jnp.dot(w_ref[...], patch_ref[...],
                          preferred_element_type=f32)
            return out + bias_ref[...]

        # Scratch init: zero halo + zero unused patch rows (avoids NaN * 0).
        padbuf_ref[...] = jnp.zeros_like(padbuf_ref)
        patch_ref[...] = jnp.zeros_like(patch_ref)

        x = x_ref[...].astype(f32)                            # (C, HW)
        h = layer_norm_relu(x, g1_ref, b1_ref)
        # TODO(synk): training-mode dropout omitted (eval-mode identity).
        h = conv_same(h, w1_ref, c1_ref)
        h = layer_norm_relu(h, g2_ref, b2_ref)
        h = conv_same(h, w2_ref, c2_ref)
        o_ref[...] = (h + x).astype(o_ref.dtype)              # residual add

    return kernel, Cg, R


# ----------------------------------------------------------------------------
# Wrapper
# ----------------------------------------------------------------------------
def residual_cnn_forward(x, params, *, conv_dtype=CONV_DTYPE):
    B, C, H, W = x.shape
    C_out, C_in, K, K2 = params["conv1_w"].shape
    assert C_in == C and C_out == C, \
        "residual add requires out_channels == in_channels"
    assert K == K2 and K % 2 == 1, "kernel_size must be odd ('same' padding)"
    # stride is fixed to 1 (required by the residual add).
    HW = H * W

    kernel, Cg, R = _make_fused_kernel(C, C_out, H, W, K, conv_dtype)

    def prep_w(w):
        # (C_out, C_in, K, K) -> (C_out, K*K*Cg) matching patch-row layout
        # row = tap*(Cg) + channel; channels >= C_in are zero-padded.
        wt = jnp.transpose(w, (0, 2, 3, 1)).reshape(C_out, K * K, C_in)
        wt = jnp.pad(wt, ((0, 0), (0, 0), (0, Cg - C_in)))
        return wt.reshape(C_out, R).astype(conv_dtype)

    def prep_ln(v):
        # gamma/beta over n_features=H -> flattened (1, H*W): index h*W+x -> v[h]
        return jnp.repeat(v.astype(jnp.float32), W).reshape(1, HW)

    args = (
        x.reshape(B, C, HW),
        prep_ln(params["ln1_gamma"]), prep_ln(params["ln1_beta"]),
        prep_w(params["conv1_w"]),
        params["conv1_b"].astype(jnp.float32).reshape(C_out, 1),
        prep_ln(params["ln2_gamma"]), prep_ln(params["ln2_beta"]),
        prep_w(params["conv2_w"]),
        params["conv2_b"].astype(jnp.float32).reshape(C_out, 1),
    )

    in_specs = [
        pl.BlockSpec((None, C, HW), lambda b: (b, 0, 0)),      # x (per batch)
        pl.BlockSpec((1, HW), lambda b: (0, 0)),               # ln1 gamma
        pl.BlockSpec((1, HW), lambda b: (0, 0)),               # ln1 beta
        pl.BlockSpec((C_out, R), lambda b: (0, 0)),            # conv1 w
        pl.BlockSpec((C_out, 1), lambda b: (0, 0)),            # conv1 b
        pl.BlockSpec((1, HW), lambda b: (0, 0)),               # ln2 gamma
        pl.BlockSpec((1, HW), lambda b: (0, 0)),               # ln2 beta
        pl.BlockSpec((C_out, R), lambda b: (0, 0)),            # conv2 w
        pl.BlockSpec((C_out, 1), lambda b: (0, 0)),            # conv2 b
    ]

    out = pl.pallas_call(
        kernel,
        out_shape=jax.ShapeDtypeStruct((B, C_out, HW), jnp.float32),
        grid=(B,),
        in_specs=in_specs,
        out_specs=pl.BlockSpec((None, C_out, HW), lambda b: (b, 0, 0)),
        scratch_shapes=[
            pltpu.VMEM((C, HW + 2 * PADL), jnp.float32),   # zero-halo buffer
            pltpu.VMEM((R, HW), conv_dtype),               # im2col patches
        ],
        compiler_params=pltpu.CompilerParams(
            dimension_semantics=("parallel",),
            vmem_limit_bytes=32 * 1024 * 1024,
        ),
    )(*args)
    return out.reshape(B, C_out, H, W)


# ----------------------------------------------------------------------------
# Params + pure-JAX reference (correctness check only)
# ----------------------------------------------------------------------------
def init_params(key, in_channels, out_channels, kernel_size, n_features):
    ks = jax.random.split(key, 8)
    fan_in = in_channels * kernel_size * kernel_size
    bound = 1.0 / float(fan_in) ** 0.5
    wshape = (out_channels, in_channels, kernel_size, kernel_size)
    return dict(
        ln1_gamma=1.0 + 0.1 * jax.random.normal(ks[0], (n_features,), jnp.float32),
        ln1_beta=0.1 * jax.random.normal(ks[1], (n_features,), jnp.float32),
        conv1_w=jax.random.uniform(ks[2], wshape, jnp.float32, -bound, bound),
        conv1_b=jax.random.uniform(ks[3], (out_channels,), jnp.float32, -bound, bound),
        ln2_gamma=1.0 + 0.1 * jax.random.normal(ks[4], (n_features,), jnp.float32),
        ln2_beta=0.1 * jax.random.normal(ks[5], (n_features,), jnp.float32),
        conv2_w=jax.random.uniform(ks[6], wshape, jnp.float32, -bound, bound),
        conv2_b=jax.random.uniform(ks[7], (out_channels,), jnp.float32, -bound, bound),
    )


def _reference(x, params, conv_dtype=jnp.float32):
    def ln(t, g, b):
        m = jnp.mean(t, axis=2, keepdims=True)
        v = jnp.mean((t - m) ** 2, axis=2, keepdims=True)
        return ((t - m) / jnp.sqrt(v + LN_EPS) * g.reshape(1, 1, -1, 1)
                + b.reshape(1, 1, -1, 1))

    def conv(t, w, b):
        p = w.shape[-1] // 2
        y = lax.conv_general_dilated(
            t.astype(conv_dtype), w.astype(conv_dtype),
            window_strides=(1, 1), padding=[(p, p), (p, p)],
            dimension_numbers=("NCHW", "OIHW", "NCHW"),
            preferred_element_type=jnp.float32)
        return y + b.reshape(1, -1, 1, 1)

    h = jax.nn.relu(ln(x, params["ln1_gamma"], params["ln1_beta"]))
    h = conv(h, params["conv1_w"], params["conv1_b"])
    h = jax.nn.relu(ln(h, params["ln2_gamma"], params["ln2_beta"]))
    h = conv(h, params["conv2_w"], params["conv2_b"])
    return h + x


if __name__ == "__main__":
    # ResidualCNN(in_channels=4, out_channels=4, kernel_size=3, stride=1,
    #             dropout_p=0.1, n_features=16); input x: (B=2, C=4, H=16, W=16)
    B, C, n_features, W = 2, 4, 16, 16
    kernel_size = 3

    key = jax.random.PRNGKey(0)
    k_in, k_p = jax.random.split(key)
    x = jax.random.normal(k_in, (B, C, n_features, W), jnp.float32)
    params = init_params(k_p, C, C, kernel_size, n_features)

    out = residual_cnn_forward(x, params)
    out = jax.block_until_ready(out)
    assert out.shape == x.shape and out.dtype == jnp.float32

    # Strict check vs a reference using the same precision policy
    # (bf16 conv operands, f32 accumulation / LN / residual).
    ref_matched = _reference(x, params, conv_dtype=CONV_DTYPE)
    if not bool(jnp.allclose(out, ref_matched, atol=1e-2, rtol=1e-2)):
        raise AssertionError("Pallas ResidualCNN mismatch vs precision-matched reference")

    # Sanity check vs the pure-f32 reference (bf16 MXU inputs => small drift).
    ref_f32 = _reference(x, params, conv_dtype=jnp.float32)
    if not bool(jnp.allclose(out, ref_f32, atol=1e-1, rtol=1e-1)):
        raise AssertionError("Pallas ResidualCNN drift vs f32 reference too large")

    print("KERNEL_OK")
</pallas_src>

<mosaic_0001>
module attributes {stable_mosaic.version = 11 : i64} {
  func.func @kernel(%arg0: i32, %arg1: memref<1x4x256xf32, #tpu.memory_space<vmem>>, %arg2: memref<1x256xf32, #tpu.memory_space<vmem>>, %arg3: memref<1x256xf32, #tpu.memory_space<vmem>>, %arg4: memref<4x72xbf16, #tpu.memory_space<vmem>>, %arg5: memref<4x1xf32, #tpu.memory_space<vmem>>, %arg6: memref<1x256xf32, #tpu.memory_space<vmem>>, %arg7: memref<1x256xf32, #tpu.memory_space<vmem>>, %arg8: memref<4x72xbf16, #tpu.memory_space<vmem>>, %arg9: memref<4x1xf32, #tpu.memory_space<vmem>>, %arg10: memref<1x4x256xf32, #tpu.memory_space<vmem>>, %arg11: memref<4x512xf32, #tpu.memory_space<vmem>>, %arg12: memref<72x256xbf16, #tpu.memory_space<vmem>>) attributes {dimension_semantics = [#tpu.dimension_semantics<parallel>], iteration_bounds = array<i64: 2>, scalar_prefetch = 0 : i64, scratch_operands = 2 : i64, tpu.core_type = #tpu.core_type<tc>, window_params = [{transform_indices = @transform_0, window_bounds = array<i64: 1, 4, 256>}, {pipeline_mode = #tpu.pipeline_mode<synchronous>, transform_indices = @transform_1, window_bounds = array<i64: 1, 256>}, {pipeline_mode = #tpu.pipeline_mode<synchronous>, transform_indices = @transform_2, window_bounds = array<i64: 1, 256>}, {pipeline_mode = #tpu.pipeline_mode<synchronous>, transform_indices = @transform_3, window_bounds = array<i64: 4, 72>}, {pipeline_mode = #tpu.pipeline_mode<synchronous>, transform_indices = @transform_4, window_bounds = array<i64: 4, 1>}, {pipeline_mode = #tpu.pipeline_mode<synchronous>, transform_indices = @transform_5, window_bounds = array<i64: 1, 256>}, {pipeline_mode = #tpu.pipeline_mode<synchronous>, transform_indices = @transform_6, window_bounds = array<i64: 1, 256>}, {pipeline_mode = #tpu.pipeline_mode<synchronous>, transform_indices = @transform_7, window_bounds = array<i64: 4, 72>}, {pipeline_mode = #tpu.pipeline_mode<synchronous>, transform_indices = @transform_8, window_bounds = array<i64: 4, 1>}, {transform_indices = @transform_9, window_bounds = array<i64: 1, 4, 256>}]} {
    %0 = tpu.iota {dimensions = array<i32: 1>} : vector<4x256xi32>
    %c16_i32 = arith.constant 16 : i32
    %c0_i32 = arith.constant 0 : i32
    %1 = arith.cmpi eq, %c16_i32, %c0_i32 : i32
    %c1_i32 = arith.constant 1 : i32
    %2 = arith.select %1, %c1_i32, %c16_i32 : i32
    %3 = vector.broadcast %2 : i32 to vector<4x256xi32>
    %4 = arith.remsi %0, %3 : vector<4x256xi32>
    %c0_i32_0 = arith.constant 0 : i32
    %5 = vector.broadcast %c0_i32_0 : i32 to vector<4x256xi32>
    %6 = arith.cmpi ne, %4, %5 : vector<4x256xi32>
    %c0_i32_1 = arith.constant 0 : i32
    %7 = vector.broadcast %c0_i32_1 : i32 to vector<4x256xi32>
    %8 = arith.cmpi slt, %4, %7 : vector<4x256xi32>
    %c0_i32_2 = arith.constant 0 : i32
    %9 = arith.cmpi slt, %2, %c0_i32_2 : i32
    %10 = vector.broadcast %9 : i1 to vector<4x256xi1>
    %11 = vector.broadcast %10 : vector<4x256xi1> to vector<4x256xi1>
    %12 = arith.xori %8, %11 : vector<4x256xi1>
    %13 = arith.andi %12, %6 : vector<4x256xi1>
    %14 = vector.broadcast %2 : i32 to vector<4x256xi32>
    %15 = arith.addi %4, %14 : vector<4x256xi32>
    %16 = arith.select %13, %15, %4 : vector<4x256xi1>, vector<4x256xi32>
    %c-1_i32 = arith.constant -1 : i32
    %17 = vector.broadcast %c-1_i32 : i32 to vector<4x256xi32>
    %18 = arith.addi %16, %17 : vector<4x256xi32>
    %c0_i32_3 = arith.constant 0 : i32
    %19 = vector.broadcast %c0_i32_3 : i32 to vector<4x256xi32>
    %20 = arith.cmpi sge, %18, %19 : vector<4x256xi32>
    %c-1_i32_4 = arith.constant -1 : i32
    %21 = vector.broadcast %c-1_i32_4 : i32 to vector<4x256xi32>
    %22 = arith.addi %16, %21 : vector<4x256xi32>
    %c16_i32_5 = arith.constant 16 : i32
    %23 = vector.broadcast %c16_i32_5 : i32 to vector<4x256xi32>
    %24 = arith.cmpi slt, %22, %23 : vector<4x256xi32>
    %25 = arith.andi %20, %24 : vector<4x256xi1>
    %26 = arith.extui %25 : vector<4x256xi1> to vector<4x256xi32>
    %27 = arith.sitofp %26 : vector<4x256xi32> to vector<4x256xf32>
    %c1_i32_6 = arith.constant 1 : i32
    %28 = vector.broadcast %c1_i32_6 : i32 to vector<4x256xi32>
    %29 = arith.addi %16, %28 : vector<4x256xi32>
    %c0_i32_7 = arith.constant 0 : i32
    %30 = vector.broadcast %c0_i32_7 : i32 to vector<4x256xi32>
    %31 = arith.cmpi sge, %29, %30 : vector<4x256xi32>
    %c1_i32_8 = arith.constant 1 : i32
    %32 = vector.broadcast %c1_i32_8 : i32 to vector<4x256xi32>
    %33 = arith.addi %16, %32 : vector<4x256xi32>
    %c16_i32_9 = arith.constant 16 : i32
    %34 = vector.broadcast %c16_i32_9 : i32 to vector<4x256xi32>
    %35 = arith.cmpi slt, %33, %34 : vector<4x256xi32>
    %36 = arith.andi %31, %35 : vector<4x256xi1>
    %37 = arith.extui %36 : vector<4x256xi1> to vector<4x256xi32>
    %38 = arith.sitofp %37 : vector<4x256xi32> to vector<4x256xf32>
    %cst = arith.constant 0.000000e+00 : f32
    %39 = vector.broadcast %cst : f32 to vector<4x512xf32>
    %c0 = arith.constant 0 : index
    %c0_10 = arith.constant 0 : index
    %40 = vector.load %arg11[%c0, %c0_10] : memref<4x512xf32, #tpu.memory_space<vmem>>, vector<4x512xf32>
    tpu.vector_store %arg11[%c0, %c0_10], %39 {strides = array<i32>} : memref<4x512xf32, #tpu.memory_space<vmem>>, vector<4x512xf32>,
    %cst_11 = arith.constant 0.000000e+00 : bf16
    %41 = vector.broadcast %cst_11 : bf16 to vector<72x256xbf16>
    %c0_12 = arith.constant 0 : index
    %c0_13 = arith.constant 0 : index
    %42 = vector.load %arg12[%c0_12, %c0_13] : memref<72x256xbf16, #tpu.memory_space<vmem>>, vector<72x256xbf16>
    tpu.vector_store %arg12[%c0_12, %c0_13], %41 {strides = array<i32>} : memref<72x256xbf16, #tpu.memory_space<vmem>>, vector<72x256xbf16>,
    %c0_14 = arith.constant 0 : index
    %c0_15 = arith.constant 0 : index
    %c0_16 = arith.constant 0 : index
    %43 = vector.load %arg1[%c0_14, %c0_15, %c0_16] : memref<1x4x256xf32, #tpu.memory_space<vmem>>, vector<1x4x256xf32>
    %44 = vector.shape_cast %43 : vector<1x4x256xf32> to vector<4x256xf32>
    %c16_i32_17 = arith.constant 16 : i32
    %45 = tpu.dynamic_rotate %44 by %c16_i32_17 dim 1 : vector<4x256xf32>, i32 -> vector<4x256xf32>
    %46 = arith.addf %44, %45 : vector<4x256xf32>
    %c32_i32 = arith.constant 32 : i32
    %47 = tpu.dynamic_rotate %46 by %c32_i32 dim 1 : vector<4x256xf32>, i32 -> vector<4x256xf32>
    %48 = arith.addf %46, %47 : vector<4x256xf32>
    %c64_i32 = arith.constant 64 : i32
    %49 = tpu.dynamic_rotate %48 by %c64_i32 dim 1 : vector<4x256xf32>, i32 -> vector<4x256xf32>
    %50 = arith.addf %48, %49 : vector<4x256xf32>
    %c128_i32 = arith.constant 128 : i32
    %51 = tpu.dynamic_rotate %50 by %c128_i32 dim 1 : vector<4x256xf32>, i32 -> vector<4x256xf32>
    %52 = arith.addf %50, %51 : vector<4x256xf32>
    %cst_18 = arith.constant 6.250000e-02 : f32
    %53 = vector.broadcast %cst_18 : f32 to vector<4x256xf32>
    %54 = arith.mulf %52, %53 : vector<4x256xf32>
    %55 = arith.subf %44, %54 : vector<4x256xf32>
    %56 = arith.mulf %55, %55 : vector<4x256xf32>
    %c16_i32_19 = arith.constant 16 : i32
    %57 = tpu.dynamic_rotate %56 by %c16_i32_19 dim 1 : vector<4x256xf32>, i32 -> vector<4x256xf32>
    %58 = arith.addf %56, %57 : vector<4x256xf32>
    %c32_i32_20 = arith.constant 32 : i32
    %59 = tpu.dynamic_rotate %58 by %c32_i32_20 dim 1 : vector<4x256xf32>, i32 -> vector<4x256xf32>
    %60 = arith.addf %58, %59 : vector<4x256xf32>
    %c64_i32_21 = arith.constant 64 : i32
    %61 = tpu.dynamic_rotate %60 by %c64_i32_21 dim 1 : vector<4x256xf32>, i32 -> vector<4x256xf32>
    %62 = arith.addf %60, %61 : vector<4x256xf32>
    %c128_i32_22 = arith.constant 128 : i32
    %63 = tpu.dynamic_rotate %62 by %c128_i32_22 dim 1 : vector<4x256xf32>, i32 -> vector<4x256xf32>
    %64 = arith.addf %62, %63 : vector<4x256xf32>
    %cst_23 = arith.constant 6.250000e-02 : f32
    %65 = vector.broadcast %cst_23 : f32 to vector<4x256xf32>
    %66 = arith.mulf %64, %65 : vector<4x256xf32>
    %cst_24 = arith.constant 9.99999974E-6 : f32
    %67 = vector.broadcast %cst_24 : f32 to vector<4x256xf32>
    %68 = arith.addf %66, %67 : vector<4x256xf32>
    %69 = math.rsqrt %68 : vector<4x256xf32>
    %70 = arith.mulf %55, %69 : vector<4x256xf32>
    %c0_25 = arith.constant 0 : index
    %c0_26 = arith.constant 0 : index
    %71 = vector.load %arg2[%c0_25, %c0_26] : memref<1x256xf32, #tpu.memory_space<vmem>>, vector<1x256xf32>
    %72 = vector.broadcast %71 : vector<1x256xf32> to vector<4x256xf32>
    %73 = arith.mulf %70, %72 : vector<4x256xf32>
    %c0_27 = arith.constant 0 : index
    %c0_28 = arith.constant 0 : index
    %74 = vector.load %arg3[%c0_27, %c0_28] : memref<1x256xf32, #tpu.memory_space<vmem>>, vector<1x256xf32>
    %75 = vector.broadcast %74 : vector<1x256xf32> to vector<4x256xf32>
    %76 = arith.addf %73, %75 : vector<4x256xf32>
    %cst_29 = arith.constant 0.000000e+00 : f32
    %77 = vector.broadcast %cst_29 : f32 to vector<4x256xf32>
    %78 = arith.maximumf %76, %77 : vector<4x256xf32>
    %c0_30 = arith.constant 0 : index
    %c128 = arith.constant 128 : index
    %79 = vector.load %arg11[%c0_30, %c128] : memref<4x512xf32, #tpu.memory_space<vmem>>, vector<4x256xf32>
    tpu.vector_store %arg11[%c0_30, %c128], %78 {strides = array<i32>} : memref<4x512xf32, #tpu.memory_space<vmem>>, vector<4x256xf32>,
    %c0_31 = arith.constant 0 : index
    %c111 = arith.constant 111 : index
    %80 = vector.load %arg11[%c0_31, %c111] : memref<4x512xf32, #tpu.memory_space<vmem>>, vector<4x256xf32>
    %81 = arith.mulf %80, %27 : vector<4x256xf32>
    %82 = arith.truncf %81 : vector<4x256xf32> to vector<4x256xbf16>
    %c0_32 = arith.constant 0 : index
    %c0_33 = arith.constant 0 : index
    %83 = vector.load %arg12[%c0_32, %c0_33] : memref<72x256xbf16, #tpu.memory_space<vmem>>, vector<4x256xbf16>
    tpu.vector_store %arg12[%c0_32, %c0_33], %82 {strides = array<i32>} : memref<72x256xbf16, #tpu.memory_space<vmem>>, vector<4x256xbf16>,
    %c0_34 = arith.constant 0 : index
    %c112 = arith.constant 112 : index
    %84 = vector.load %arg11[%c0_34, %c112] : memref<4x512xf32, #tpu.memory_space<vmem>>, vector<4x256xf32>
    %85 = arith.truncf %84 : vector<4x256xf32> to vector<4x256xbf16>
    %c8 = arith.constant 8 : index
    %c0_35 = arith.constant 0 : index
    %86 = vector.load %arg12[%c8, %c0_35] : memref<72x256xbf16, #tpu.memory_space<vmem>>, vector<4x256xbf16>
    tpu.vector_store %arg12[%c8, %c0_35], %85 {strides = array<i32>} : memref<72x256xbf16, #tpu.memory_space<vmem>>, vector<4x256xbf16>,
    %c0_36 = arith.constant 0 : index
    %c113 = arith.constant 113 : index
    %87 = vector.load %arg11[%c0_36, %c113] : memref<4x512xf32, #tpu.memory_space<vmem>>, vector<4x256xf32>
    %88 = arith.mulf %87, %38 : vector<4x256xf32>
    %89 = arith.truncf %88 : vector<4x256xf32> to vector<4x256xbf16>
    %c16 = arith.constant 16 : index
    %c0_37 = arith.constant 0 : index
    %90 = vector.load %arg12[%c16, %c0_37] : memref<72x256xbf16, #tpu.memory_space<vmem>>, vector<4x256xbf16>
    tpu.vector_store %arg12[%c16, %c0_37], %89 {strides = array<i32>} : memref<72x256xbf16, #tpu.memory_space<vmem>>, vector<4x256xbf16>,
    %c0_38 = arith.constant 0 : index
    %c127 = arith.constant 127 : index
    %91 = vector.load %arg11[%c0_38, %c127] : memref<4x512xf32, #tpu.memory_space<vmem>>, vector<4x256xf32>
    %92 = arith.mulf %91, %27 : vector<4x256xf32>
    %93 = arith.truncf %92 : vector<4x256xf32> to vector<4x256xbf16>
    %c24 = arith.constant 24 : index
    %c0_39 = arith.constant 0 : index
    %94 = vector.load %arg12[%c24, %c0_39] : memref<72x256xbf16, #tpu.memory_space<vmem>>, vector<4x256xbf16>
    tpu.vector_store %arg12[%c24, %c0_39], %93 {strides = array<i32>} : memref<72x256xbf16, #tpu.memory_space<vmem>>, vector<4x256xbf16>,
    %c0_40 = arith.constant 0 : index
    %c128_41 = arith.constant 128 : index
    %95 = vector.load %arg11[%c0_40, %c128_41] : memref<4x512xf32, #tpu.memory_space<vmem>>, vector<4x256xf32>
    %96 = arith.truncf %95 : vector<4x256xf32> to vector<4x256xbf16>
    %c32 = arith.constant 32 : index
    %c0_42 = arith.constant 0 : index
    %97 = vector.load %arg12[%c32, %c0_42] : memref<72x256xbf16, #tpu.memory_space<vmem>>, vector<4x256xbf16>
    tpu.vector_store %arg12[%c32, %c0_42], %96 {strides = array<i32>} : memref<72x256xbf16, #tpu.memory_space<vmem>>, vector<4x256xbf16>,
    %c0_43 = arith.constant 0 : index
    %c129 = arith.constant 129 : index
    %98 = vector.load %arg11[%c0_43, %c129] : memref<4x512xf32, #tpu.memory_space<vmem>>, vector<4x256xf32>
    %99 = arith.mulf %98, %38 : vector<4x256xf32>
    %100 = arith.truncf %99 : vector<4x256xf32> to vector<4x256xbf16>
    %c40 = arith.constant 40 : index
    %c0_44 = arith.constant 0 : index
    %101 = vector.load %arg12[%c40, %c0_44] : memref<72x256xbf16, #tpu.memory_space<vmem>>, vector<4x256xbf16>
    tpu.vector_store %arg12[%c40, %c0_44], %100 {strides = array<i32>} : memref<72x256xbf16, #tpu.memory_space<vmem>>, vector<4x256xbf16>,
    %c0_45 = arith.constant 0 : index
    %c143 = arith.constant 143 : index
    %102 = vector.load %arg11[%c0_45, %c143] : memref<4x512xf32, #tpu.memory_space<vmem>>, vector<4x256xf32>
    %103 = arith.mulf %102, %27 : vector<4x256xf32>
    %104 = arith.truncf %103 : vector<4x256xf32> to vector<4x256xbf16>
    %c48 = arith.constant 48 : index
    %c0_46 = arith.constant 0 : index
    %105 = vector.load %arg12[%c48, %c0_46] : memref<72x256xbf16, #tpu.memory_space<vmem>>, vector<4x256xbf16>
    tpu.vector_store %arg12[%c48, %c0_46], %104 {strides = array<i32>} : memref<72x256xbf16, #tpu.memory_space<vmem>>, vector<4x256xbf16>,
    %c0_47 = arith.constant 0 : index
    %c144 = arith.constant 144 : index
    %106 = vector.load %arg11[%c0_47, %c144] : memref<4x512xf32, #tpu.memory_space<vmem>>, vector<4x256xf32>
    %107 = arith.truncf %106 : vector<4x256xf32> to vector<4x256xbf16>
    %c56 = arith.constant 56 : index
    %c0_48 = arith.constant 0 : index
    %108 = vector.load %arg12[%c56, %c0_48] : memref<72x256xbf16, #tpu.memory_space<vmem>>, vector<4x256xbf16>
    tpu.vector_store %arg12[%c56, %c0_48], %107 {strides = array<i32>} : memref<72x256xbf16, #tpu.memory_space<vmem>>, vector<4x256xbf16>,
    %c0_49 = arith.constant 0 : index
    %c145 = arith.constant 145 : index
    %109 = vector.load %arg11[%c0_49, %c145] : memref<4x512xf32, #tpu.memory_space<vmem>>, vector<4x256xf32>
    %110 = arith.mulf %109, %38 : vector<4x256xf32>
    %111 = arith.truncf %110 : vector<4x256xf32> to vector<4x256xbf16>
    %c64 = arith.constant 64 : index
    %c0_50 = arith.constant 0 : index
    %112 = vector.load %arg12[%c64, %c0_50] : memref<72x256xbf16, #tpu.memory_space<vmem>>, vector<4x256xbf16>
    tpu.vector_store %arg12[%c64, %c0_50], %111 {strides = array<i32>} : memref<72x256xbf16, #tpu.memory_space<vmem>>, vector<4x256xbf16>,
    %c0_51 = arith.constant 0 : index
    %c0_52 = arith.constant 0 : index
    %113 = vector.load %arg4[%c0_51, %c0_52] : memref<4x72xbf16, #tpu.memory_space<vmem>>, vector<4x72xbf16>
    %c0_53 = arith.constant 0 : index
    %c0_54 = arith.constant 0 : index
    %114 = vector.load %arg12[%c0_53, %c0_54] : memref<72x256xbf16, #tpu.memory_space<vmem>>, vector<72x256xbf16>
    %cst_55 = arith.constant dense<0.000000e+00> : vector<4x256xf32>
    %115 = tpu.matmul %113, %114, %cst_55 {dimension_numbers = #tpu.dot_dimension_numbers<[1], [0], [0], [1], [0, 0, 1, 1], [], []>} : vector<4x72xbf16>, vector<72x256xbf16>, vector<4x256xf32> -> vector<4x256xf32>
    %c0_56 = arith.constant 0 : index
    %c0_57 = arith.constant 0 : index
    %116 = vector.load %arg5[%c0_56, %c0_57] : memref<4x1xf32, #tpu.memory_space<vmem>>, vector<4x1xf32>
    %117 = vector.broadcast %116 : vector<4x1xf32> to vector<4x256xf32>
    %118 = arith.addf %115, %117 : vector<4x256xf32>
    %c16_i32_58 = arith.constant 16 : i32
    %119 = tpu.dynamic_rotate %118 by %c16_i32_58 dim 1 : vector<4x256xf32>, i32 -> vector<4x256xf32>
    %120 = arith.addf %118, %119 : vector<4x256xf32>
    %c32_i32_59 = arith.constant 32 : i32
    %121 = tpu.dynamic_rotate %120 by %c32_i32_59 dim 1 : vector<4x256xf32>, i32 -> vector<4x256xf32>
    %122 = arith.addf %120, %121 : vector<4x256xf32>
    %c64_i32_60 = arith.constant 64 : i32
    %123 = tpu.dynamic_rotate %122 by %c64_i32_60 dim 1 : vector<4x256xf32>, i32 -> vector<4x256xf32>
    %124 = arith.addf %122, %123 : vector<4x256xf32>
    %c128_i32_61 = arith.constant 128 : i32
    %125 = tpu.dynamic_rotate %124 by %c128_i32_61 dim 1 : vector<4x256xf32>, i32 -> vector<4x256xf32>
    %126 = arith.addf %124, %125 : vector<4x256xf32>
    %cst_62 = arith.constant 6.250000e-02 : f32
    %127 = vector.broadcast %cst_62 : f32 to vector<4x256xf32>
    %128 = arith.mulf %126, %127 : vector<4x256xf32>
    %129 = arith.subf %118, %128 : vector<4x256xf32>
    %130 = arith.mulf %129, %129 : vector<4x256xf32>
    %c16_i32_63 = arith.constant 16 : i32
    %131 = tpu.dynamic_rotate %130 by %c16_i32_63 dim 1 : vector<4x256xf32>, i32 -> vector<4x256xf32>
    %132 = arith.addf %130, %131 : vector<4x256xf32>
    %c32_i32_64 = arith.constant 32 : i32
    %133 = tpu.dynamic_rotate %132 by %c32_i32_64 dim 1 : vector<4x256xf32>, i32 -> vector<4x256xf32>
    %134 = arith.addf %132, %133 : vector<4x256xf32>
    %c64_i32_65 = arith.constant 64 : i32
    %135 = tpu.dynamic_rotate %134 by %c64_i32_65 dim 1 : vector<4x256xf32>, i32 -> vector<4x256xf32>
    %136 = arith.addf %134, %135 : vector<4x256xf32>
    %c128_i32_66 = arith.constant 128 : i32
    %137 = tpu.dynamic_rotate %136 by %c128_i32_66 dim 1 : vector<4x256xf32>, i32 -> vector<4x256xf32>
    %138 = arith.addf %136, %137 : vector<4x256xf32>
    %cst_67 = arith.constant 6.250000e-02 : f32
    %139 = vector.broadcast %cst_67 : f32 to vector<4x256xf32>
    %140 = arith.mulf %138, %139 : vector<4x256xf32>
    %cst_68 = arith.constant 9.99999974E-6 : f32
    %141 = vector.broadcast %cst_68 : f32 to vector<4x256xf32>
    %142 = arith.addf %140, %141 : vector<4x256xf32>
    %143 = math.rsqrt %142 : vector<4x256xf32>
    %144 = arith.mulf %129, %143 : vector<4x256xf32>
    %c0_69 = arith.constant 0 : index
    %c0_70 = arith.constant 0 : index
    %145 = vector.load %arg6[%c0_69, %c0_70] : memref<1x256xf32, #tpu.memory_space<vmem>>, vector<1x256xf32>
    %146 = vector.broadcast %145 : vector<1x256xf32> to vector<4x256xf32>
    %147 = arith.mulf %144, %146 : vector<4x256xf32>
    %c0_71 = arith.constant 0 : index
    %c0_72 = arith.constant 0 : index
    %148 = vector.load %arg7[%c0_71, %c0_72] : memref<1x256xf32, #tpu.memory_space<vmem>>, vector<1x256xf32>
    %149 = vector.broadcast %148 : vector<1x256xf32> to vector<4x256xf32>
    %150 = arith.addf %147, %149 : vector<4x256xf32>
    %cst_73 = arith.constant 0.000000e+00 : f32
    %151 = vector.broadcast %cst_73 : f32 to vector<4x256xf32>
    %152 = arith.maximumf %150, %151 : vector<4x256xf32>
    %c0_74 = arith.constant 0 : index
    %c128_75 = arith.constant 128 : index
    %153 = vector.load %arg11[%c0_74, %c128_75] : memref<4x512xf32, #tpu.memory_space<vmem>>, vector<4x256xf32>
    tpu.vector_store %arg11[%c0_74, %c128_75], %152 {strides = array<i32>} : memref<4x512xf32, #tpu.memory_space<vmem>>, vector<4x256xf32>,
    %c0_76 = arith.constant 0 : index
    %c111_77 = arith.constant 111 : index
    %154 = vector.load %arg11[%c0_76, %c111_77] : memref<4x512xf32, #tpu.memory_space<vmem>>, vector<4x256xf32>
    %155 = arith.mulf %154, %27 : vector<4x256xf32>
    %156 = arith.truncf %155 : vector<4x256xf32> to vector<4x256xbf16>
    %c0_78 = arith.constant 0 : index
    %c0_79 = arith.constant 0 : index
    %157 = vector.load %arg12[%c0_78, %c0_79] : memref<72x256xbf16, #tpu.memory_space<vmem>>, vector<4x256xbf16>
    tpu.vector_store %arg12[%c0_78, %c0_79], %156 {strides = array<i32>} : memref<72x256xbf16, #tpu.memory_space<vmem>>, vector<4x256xbf16>,
    %c0_80 = arith.constant 0 : index
    %c112_81 = arith.constant 112 : index
    %158 = vector.load %arg11[%c0_80, %c112_81] : memref<4x512xf32, #tpu.memory_space<vmem>>, vector<4x256xf32>
    %159 = arith.truncf %158 : vector<4x256xf32> to vector<4x256xbf16>
    %c8_82 = arith.constant 8 : index
    %c0_83 = arith.constant 0 : index
    %160 = vector.load %arg12[%c8_82, %c0_83] : memref<72x256xbf16, #tpu.memory_space<vmem>>, vector<4x256xbf16>
    tpu.vector_store %arg12[%c8_82, %c0_83], %159 {strides = array<i32>} : memref<72x256xbf16, #tpu.memory_space<vmem>>, vector<4x256xbf16>,
    %c0_84 = arith.constant 0 : index
    %c113_85 = arith.constant 113 : index
    %161 = vector.load %arg11[%c0_84, %c113_85] : memref<4x512xf32, #tpu.memory_space<vmem>>, vector<4x256xf32>
    %162 = arith.mulf %161, %38 : vector<4x256xf32>
    %163 = arith.truncf %162 : vector<4x256xf32> to vector<4x256xbf16>
    %c16_86 = arith.constant 16 : index
    %c0_87 = arith.constant 0 : index
    %164 = vector.load %arg12[%c16_86, %c0_87] : memref<72x256xbf16, #tpu.memory_space<vmem>>, vector<4x256xbf16>
    tpu.vector_store %arg12[%c16_86, %c0_87], %163 {strides = array<i32>} : memref<72x256xbf16, #tpu.memory_space<vmem>>, vector<4x256xbf16>,
    %c0_88 = arith.constant 0 : index
    %c127_89 = arith.constant 127 : index
    %165 = vector.load %arg11[%c0_88, %c127_89] : memref<4x512xf32, #tpu.memory_space<vmem>>, vector<4x256xf32>
    %166 = arith.mulf %165, %27 : vector<4x256xf32>
    %167 = arith.truncf %166 : vector<4x256xf32> to vector<4x256xbf16>
    %c24_90 = arith.constant 24 : index
    %c0_91 = arith.constant 0 : index
    %168 = vector.load %arg12[%c24_90, %c0_91] : memref<72x256xbf16, #tpu.memory_space<vmem>>, vector<4x256xbf16>
    tpu.vector_store %arg12[%c24_90, %c0_91], %167 {strides = array<i32>} : memref<72x256xbf16, #tpu.memory_space<vmem>>, vector<4x256xbf16>,
    %c0_92 = arith.constant 0 : index
    %c128_93 = arith.constant 128 : index
    %169 = vector.load %arg11[%c0_92, %c128_93] : memref<4x512xf32, #tpu.memory_space<vmem>>, vector<4x256xf32>
    %170 = arith.truncf %169 : vector<4x256xf32> to vector<4x256xbf16>
    %c32_94 = arith.constant 32 : index
    %c0_95 = arith.constant 0 : index
    %171 = vector.load %arg12[%c32_94, %c0_95] : memref<72x256xbf16, #tpu.memory_space<vmem>>, vector<4x256xbf16>
    tpu.vector_store %arg12[%c32_94, %c0_95], %170 {strides = array<i32>} : memref<72x256xbf16, #tpu.memory_space<vmem>>, vector<4x256xbf16>,
    %c0_96 = arith.constant 0 : index
    %c129_97 = arith.constant 129 : index
    %172 = vector.load %arg11[%c0_96, %c129_97] : memref<4x512xf32, #tpu.memory_space<vmem>>, vector<4x256xf32>
    %173 = arith.mulf %172, %38 : vector<4x256xf32>
    %174 = arith.truncf %173 : vector<4x256xf32> to vector<4x256xbf16>
    %c40_98 = arith.constant 40 : index
    %c0_99 = arith.constant 0 : index
    %175 = vector.load %arg12[%c40_98, %c0_99] : memref<72x256xbf16, #tpu.memory_space<vmem>>, vector<4x256xbf16>
    tpu.vector_store %arg12[%c40_98, %c0_99], %174 {strides = array<i32>} : memref<72x256xbf16, #tpu.memory_space<vmem>>, vector<4x256xbf16>,
    %c0_100 = arith.constant 0 : index
    %c143_101 = arith.constant 143 : index
    %176 = vector.load %arg11[%c0_100, %c143_101] : memref<4x512xf32, #tpu.memory_space<vmem>>, vector<4x256xf32>
    %177 = arith.mulf %176, %27 : vector<4x256xf32>
    %178 = arith.truncf %177 : vector<4x256xf32> to vector<4x256xbf16>
    %c48_102 = arith.constant 48 : index
    %c0_103 = arith.constant 0 : index
    %179 = vector.load %arg12[%c48_102, %c0_103] : memref<72x256xbf16, #tpu.memory_space<vmem>>, vector<4x256xbf16>
    tpu.vector_store %arg12[%c48_102, %c0_103], %178 {strides = array<i32>} : memref<72x256xbf16, #tpu.memory_space<vmem>>, vector<4x256xbf16>,
    %c0_104 = arith.constant 0 : index
    %c144_105 = arith.constant 144 : index
    %180 = vector.load %arg11[%c0_104, %c144_105] : memref<4x512xf32, #tpu.memory_space<vmem>>, vector<4x256xf32>
    %181 = arith.truncf %180 : vector<4x256xf32> to vector<4x256xbf16>
    %c56_106 = arith.constant 56 : index
    %c0_107 = arith.constant 0 : index
    %182 = vector.load %arg12[%c56_106, %c0_107] : memref<72x256xbf16, #tpu.memory_space<vmem>>, vector<4x256xbf16>
    tpu.vector_store %arg12[%c56_106, %c0_107], %181 {strides = array<i32>} : memref<72x256xbf16, #tpu.memory_space<vmem>>, vector<4x256xbf16>,
    %c0_108 = arith.constant 0 : index
    %c145_109 = arith.constant 145 : index
    %183 = vector.load %arg11[%c0_108, %c145_109] : memref<4x512xf32, #tpu.memory_space<vmem>>, vector<4x256xf32>
    %184 = arith.mulf %183, %38 : vector<4x256xf32>
    %185 = arith.truncf %184 : vector<4x256xf32> to vector<4x256xbf16>
    %c64_110 = arith.constant 64 : index
    %c0_111 = arith.constant 0 : index
    %186 = vector.load %arg12[%c64_110, %c0_111] : memref<72x256xbf16, #tpu.memory_space<vmem>>, vector<4x256xbf16>
    tpu.vector_store %arg12[%c64_110, %c0_111], %185 {strides = array<i32>} : memref<72x256xbf16, #tpu.memory_space<vmem>>, vector<4x256xbf16>,
    %c0_112 = arith.constant 0 : index
    %c0_113 = arith.constant 0 : index
    %187 = vector.load %arg8[%c0_112, %c0_113] : memref<4x72xbf16, #tpu.memory_space<vmem>>, vector<4x72xbf16>
    %c0_114 = arith.constant 0 : index
    %c0_115 = arith.constant 0 : index
    %188 = vector.load %arg12[%c0_114, %c0_115] : memref<72x256xbf16, #tpu.memory_space<vmem>>, vector<72x256xbf16>
    %cst_116 = arith.constant dense<0.000000e+00> : vector<4x256xf32>
    %189 = tpu.matmul %187, %188, %cst_116 {dimension_numbers = #tpu.dot_dimension_numbers<[1], [0], [0], [1], [0, 0, 1, 1], [], []>} : vector<4x72xbf16>, vector<72x256xbf16>, vector<4x256xf32> -> vector<4x256xf32>
    %c0_117 = arith.constant 0 : index
    %c0_118 = arith.constant 0 : index
    %190 = vector.load %arg9[%c0_117, %c0_118] : memref<4x1xf32, #tpu.memory_space<vmem>>, vector<4x1xf32>
    %191 = vector.broadcast %190 : vector<4x1xf32> to vector<4x256xf32>
    %192 = arith.addf %189, %191 : vector<4x256xf32>
    %193 = arith.addf %192, %44 : vector<4x256xf32>
    %c0_119 = arith.constant 0 : index
    %c0_120 = arith.constant 0 : index
    %c0_121 = arith.constant 0 : index
    %194 = vector.load %arg10[%c0_119, %c0_120, %c0_121] : memref<1x4x256xf32, #tpu.memory_space<vmem>>, vector<1x4x256xf32>
    %195 = vector.shape_cast %194 : vector<1x4x256xf32> to vector<4x256xf32>
    %196 = vector.shape_cast %193 : vector<4x256xf32> to vector<1x4x256xf32>
    tpu.vector_store %arg10[%c0_119, %c0_120, %c0_121], %196 {strides = array<i32>} : memref<1x4x256xf32, #tpu.memory_space<vmem>>, vector<1x4x256xf32>,
    return
  }
  func.func @transform_0(%arg0: i32) -> (i32, i32, i32) {
    %c0_i32 = arith.constant 0 : i32
    %c0_i32_0 = arith.constant 0 : i32
    %c0_i32_1 = arith.constant 0 : i32
    return %arg0, %c0_i32, %c0_i32_0 : i32, i32, i32
  }
  func.func @transform_1(%arg0: i32) -> (i32, i32) {
    %c0_i32 = arith.constant 0 : i32
    %c0_i32_0 = arith.constant 0 : i32
    %c0_i32_1 = arith.constant 0 : i32
    return %c0_i32, %c0_i32_0 : i32, i32
  }
  func.func @transform_2(%arg0: i32) -> (i32, i32) {
    %c0_i32 = arith.constant 0 : i32
    %c0_i32_0 = arith.constant 0 : i32
    %c0_i32_1 = arith.constant 0 : i32
    return %c0_i32, %c0_i32_0 : i32, i32
  }
  func.func @transform_3(%arg0: i32) -> (i32, i32) {
    %c0_i32 = arith.constant 0 : i32
    %c0_i32_0 = arith.constant 0 : i32
    %c0_i32_1 = arith.constant 0 : i32
    return %c0_i32, %c0_i32_0 : i32, i32
  }
  func.func @transform_4(%arg0: i32) -> (i32, i32) {
    %c0_i32 = arith.constant 0 : i32
    %c0_i32_0 = arith.constant 0 : i32
    %c0_i32_1 = arith.constant 0 : i32
    return %c0_i32, %c0_i32_0 : i32, i32
  }
  func.func @transform_5(%arg0: i32) -> (i32, i32) {
    %c0_i32 = arith.constant 0 : i32
    %c0_i32_0 = arith.constant 0 : i32
    %c0_i32_1 = arith.constant 0 : i32
    return %c0_i32, %c0_i32_0 : i32, i32
  }
  func.func @transform_6(%arg0: i32) -> (i32, i32) {
    %c0_i32 = arith.constant 0 : i32
    %c0_i32_0 = arith.constant 0 : i32
    %c0_i32_1 = arith.constant 0 : i32
    return %c0_i32, %c0_i32_0 : i32, i32
  }
  func.func @transform_7(%arg0: i32) -> (i32, i32) {
    %c0_i32 = arith.constant 0 : i32
    %c0_i32_0 = arith.constant 0 : i32
    %c0_i32_1 = arith.constant 0 : i32
    return %c0_i32, %c0_i32_0 : i32, i32
  }
  func.func @transform_8(%arg0: i32) -> (i32, i32) {
    %c0_i32 = arith.constant 0 : i32
    %c0_i32_0 = arith.constant 0 : i32
    %c0_i32_1 = arith.constant 0 : i32
    return %c0_i32, %c0_i32_0 : i32, i32
  }
  func.func @transform_9(%arg0: i32) -> (i32, i32, i32) {
    %c0_i32 = arith.constant 0 : i32
    %c0_i32_0 = arith.constant 0 : i32
    %c0_i32_1 = arith.constant 0 : i32
    return %arg0, %c0_i32, %c0_i32_0 : i32, i32, i32
  }
}

</mosaic_0001>

<llo_original>
// kernel: tpu_custom_call.1
$region0: #{tpu_custom_call.1}
  #allocation0 [shape = 'u32[]', space=smem, size = 0x4, offset = 0x4, fixed_abs, tag = 'smem constant byte address 0x4 - core index']
  #allocation1 [shape = 'u32[144,128]{1,0:T(1,128)}', space=vmem, size = 0x12000, scoped, tag = 'internal scratch']
  #allocation2 [shape = 'f32[4,512]{1,0:T(4,128)}', space=vmem, size = 0x2000, scoped, tag = 'scratch operand']
  #allocation3 [shape = 'bf16[72,256]{1,0:T(8,128)(2,1)}', space=vmem, size = 0x9000, scoped, tag = 'scratch operand']
  %s0 = inlined_call_operand.hbm [shape: f32[2,4,256], index: 0, kind: input, shape index: {}]
  %s1 = inlined_call_operand.vmem [shape: f32[1,256], index: 1, kind: input, shape index: {}]
  %s2 = inlined_call_operand.vmem [shape: f32[1,256], index: 2, kind: input, shape index: {}]
  %s3 = inlined_call_operand.vmem [shape: bf16[4,72], index: 3, kind: input, shape index: {}]
  %s4 = inlined_call_operand.vmem [shape: f32[4,1], index: 4, kind: input, shape index: {}]
  %s5 = inlined_call_operand.vmem [shape: f32[1,256], index: 5, kind: input, shape index: {}]
  %s6 = inlined_call_operand.vmem [shape: f32[1,256], index: 6, kind: input, shape index: {}]
  %s7 = inlined_call_operand.vmem [shape: bf16[4,72], index: 7, kind: input, shape index: {}]
  %s8 = inlined_call_operand.vmem [shape: f32[4,1], index: 8, kind: input, shape index: {}]
  %s9 = inlined_call_operand.hbm [shape: f32[2,4,256], index: 9, kind: output, shape index: {}]
  %s10 = sld [smem:[#allocation0]]
  $region73: #{tpu_custom_call.1} parent=0
    _
  %s12 = ssub.s32 1, %s10
  %s13 = scalar_select 0, %s12, %s10
  $region1: #{tpu_custom_call.1} parent=0
    #allocation4 [shape = 'u8[8192]{0}', space=vmem, size = 0x2000, scoped, tag = 'input window, operand 0']
    #allocation5 [shape = 's32[2]{0}', space=sflag, size = 0x8, scoped, tag = 'scoped memory for tpu_custom_call.1']
    #allocation6 [shape = 's32[2]{0}', space=sflag, size = 0x8, scoped, tag = 'scoped memory for tpu_custom_call.1']
    #allocation7 [shape = 'u8[8192]{0}', space=vmem, size = 0x2000, scoped, tag = 'output window, operand 0']
    %14 = vsyncpa [#allocation5], 0
    %s15 = scalar_lea.sflag [#allocation5], 1
    %16 = vsyncpa %s15, 0
    %17 = vsyncpa [#allocation6], 0
    %s18 = scalar_lea.sflag [#allocation6], 1
    %19 = vsyncpa %s18, 0
    loop: start=0, step=1, limit=4
    $region2: #{tpu_custom_call.1} parent=1 // loop_pre_header
      _
    $region3: #{tpu_custom_call.1} parent=1 // loop_header
      %s21 = sphi 0, %s25
      %p22 = scmp.ge.s32.totalorder %s21, 4
      %s31 = sphi 0, %s33
      %s34 = sphi 0, %s31
      %s35 = sphi 0, %s34
      %s51 = sphi 0, %s35
      %s55 = sphi 0, %s55
      %s57 = sphi 0, %s55
      %s58 = sphi 0, %s57
      %s72 = sphi 0, %s58
      %s76 = sphi 0, %s76
      %s78 = sphi 0, %s76
      %s79 = sphi 0, %s78
      %s93 = sphi 0, %s79
      %s97 = sphi 0, %s97
      %s99 = sphi 0, %s97
      %s100 = sphi 0, %s99
      %s114 = sphi 0, %s100
      %s118 = sphi 0, %s118
      %s120 = sphi 0, %s118
      %s121 = sphi 0, %s120
      %s135 = sphi 0, %s121
      %s139 = sphi 0, %s139
      %s141 = sphi 0, %s139
      %s142 = sphi 0, %s141
      %s156 = sphi 0, %s142
      %s160 = sphi 0, %s160
      %s162 = sphi 0, %s160
      %s163 = sphi 0, %s162
      %s177 = sphi 0, %s163
      %s181 = sphi 0, %s181
      %s183 = sphi 0, %s181
      %s184 = sphi 0, %s183
      %s198 = sphi 0, %s184
      %s202 = sphi 0, %s202
      %s204 = sphi 0, %s202
      %s205 = sphi 0, %s204
      %s219 = sphi 0, %s205
      %s225 = sphi 0, %s227
      %s228 = sphi 0, %s225
      %s229 = sphi 0, %s228
      %s245 = sphi 0, %s229
    $region4: #{tpu_custom_call.1} parent=1 // loop_header_branch
      %24 = sbr.rel (%p22) target = $region8
    $region5: #{tpu_custom_call.1} parent=1 // loop_body
      %s26 = ssub.s32 %s21, 1
      %s27 = ssub.s32 %s21, 2
      %s28 = sadd.s32 %s21, 1
      %s29 = ssub.s32 %s21, %s28
      %p30 = scmp.eq.s32.totalorder %s29, 0
      %s32 = sadd.s32 %s31, 1
      %s33 = scalar_select %p30, %s31, %s32
      %p36 = pneg %p30
      %p37 = scmp.eq.s32.totalorder %s21, 1
      %p38 = por %p36, %p37
      %p39 = scmp.ne.s32.totalorder %s31, %s34
      %p40 = scmp.eq.s32.totalorder %s21, 0
      %p41 = por %p39, %p40
      %p42 = scmp.ne.s32.totalorder %s31, %s34
      %p43 = scmp.eq.s32.totalorder %s26, 1
      %p44 = por %p42, %p43
      %p45 = scmp.ne.s32.totalorder %s34, %s35
      %p46 = scmp.eq.s32.totalorder %s26, 0
      %p47 = por %p45, %p46
      %p48 = scmp.ne.s32.totalorder %s34, %s35
      %p49 = scmp.eq.s32.totalorder %s27, 1
      %p50 = por %p48, %p49
      %p52 = scmp.ne.s32.totalorder %s35, %s51
      %p53 = scmp.eq.s32.totalorder %s27, 0
      %p54 = por %p52, %p53
      %s56 = sadd.s32 %s55, 1
      %p59 = scmp.eq.s32.totalorder %s21, 1
      %p60 = scmp.ne.s32.totalorder %s55, %s57
      %p61 = scmp.eq.s32.totalorder %s21, 0
      %p62 = por %p60, %p61
      %p63 = scmp.ne.s32.totalorder %s55, %s57
      %p64 = scmp.eq.s32.totalorder %s26, 1
      %p65 = por %p63, %p64
      %p66 = scmp.ne.s32.totalorder %s57, %s58
      %p67 = scmp.eq.s32.totalorder %s26, 0
      %p68 = por %p66, %p67
      %p69 = scmp.ne.s32.totalorder %s57, %s58
      %p70 = scmp.eq.s32.totalorder %s27, 1
      %p71 = por %p69, %p70
      %p73 = scmp.ne.s32.totalorder %s58, %s72
      %p74 = scmp.eq.s32.totalorder %s27, 0
      %p75 = por %p73, %p74
      %s77 = sadd.s32 %s76, 1
      %p80 = scmp.eq.s32.totalorder %s21, 1
      %p81 = scmp.ne.s32.totalorder %s76, %s78
      %p82 = scmp.eq.s32.totalorder %s21, 0
      %p83 = por %p81, %p82
      %p84 = scmp.ne.s32.totalorder %s76, %s78
      %p85 = scmp.eq.s32.totalorder %s26, 1
      %p86 = por %p84, %p85
      %p87 = scmp.ne.s32.totalorder %s78, %s79
      %p88 = scmp.eq.s32.totalorder %s26, 0
      %p89 = por %p87, %p88
      %p90 = scmp.ne.s32.totalorder %s78, %s79
      %p91 = scmp.eq.s32.totalorder %s27, 1
      %p92 = por %p90, %p91
      %p94 = scmp.ne.s32.totalorder %s79, %s93
      %p95 = scmp.eq.s32.totalorder %s27, 0
      %p96 = por %p94, %p95
      %s98 = sadd.s32 %s97, 1
      %p101 = scmp.eq.s32.totalorder %s21, 1
      %p102 = scmp.ne.s32.totalorder %s97, %s99
      %p103 = scmp.eq.s32.totalorder %s21, 0
      %p104 = por %p102, %p103
      %p105 = scmp.ne.s32.totalorder %s97, %s99
      %p106 = scmp.eq.s32.totalorder %s26, 1
      %p107 = por %p105, %p106
      %p108 = scmp.ne.s32.totalorder %s99, %s100
      %p109 = scmp.eq.s32.totalorder %s26, 0
      %p110 = por %p108, %p109
      %p111 = scmp.ne.s32.totalorder %s99, %s100
      %p112 = scmp.eq.s32.totalorder %s27, 1
      %p113 = por %p111, %p112
      %p115 = scmp.ne.s32.totalorder %s100, %s114
      %p116 = scmp.eq.s32.totalorder %s27, 0
      %p117 = por %p115, %p116
      %s119 = sadd.s32 %s118, 1
      %p122 = scmp.eq.s32.totalorder %s21, 1
      %p123 = scmp.ne.s32.totalorder %s118, %s120
      %p124 = scmp.eq.s32.totalorder %s21, 0
      %p125 = por %p123, %p124
      %p126 = scmp.ne.s32.totalorder %s118, %s120
      %p127 = scmp.eq.s32.totalorder %s26, 1
      %p128 = por %p126, %p127
      %p129 = scmp.ne.s32.totalorder %s120, %s121
      %p130 = scmp.eq.s32.totalorder %s26, 0
      %p131 = por %p129, %p130
      %p132 = scmp.ne.s32.totalorder %s120, %s121
      %p133 = scmp.eq.s32.totalorder %s27, 1
      %p134 = por %p132, %p133
      %p136 = scmp.ne.s32.totalorder %s121, %s135
      %p137 = scmp.eq.s32.totalorder %s27, 0
      %p138 = por %p136, %p137
      %s140 = sadd.s32 %s139, 1
      %p143 = scmp.eq.s32.totalorder %s21, 1
      %p144 = scmp.ne.s32.totalorder %s139, %s141
      %p145 = scmp.eq.s32.totalorder %s21, 0
      %p146 = por %p144, %p145
      %p147 = scmp.ne.s32.totalorder %s139, %s141
      %p148 = scmp.eq.s32.totalorder %s26, 1
      %p149 = por %p147, %p148
      %p150 = scmp.ne.s32.totalorder %s141, %s142
      %p151 = scmp.eq.s32.totalorder %s26, 0
      %p152 = por %p150, %p151
      %p153 = scmp.ne.s32.totalorder %s141, %s142
      %p154 = scmp.eq.s32.totalorder %s27, 1
      %p155 = por %p153, %p154
      %p157 = scmp.ne.s32.totalorder %s142, %s156
      %p158 = scmp.eq.s32.totalorder %s27, 0
      %p159 = por %p157, %p158
      %s161 = sadd.s32 %s160, 1
      %p164 = scmp.eq.s32.totalorder %s21, 1
      %p165 = scmp.ne.s32.totalorder %s160, %s162
      %p166 = scmp.eq.s32.totalorder %s21, 0
      %p167 = por %p165, %p166
      %p168 = scmp.ne.s32.totalorder %s160, %s162
      %p169 = scmp.eq.s32.totalorder %s26, 1
      %p170 = por %p168, %p169
      %p171 = scmp.ne.s32.totalorder %s162, %s163
      %p172 = scmp.eq.s32.totalorder %s26, 0
      %p173 = por %p171, %p172
      %p174 = scmp.ne.s32.totalorder %s162, %s163
      %p175 = scmp.eq.s32.totalorder %s27, 1
      %p176 = por %p174, %p175
      %p178 = scmp.ne.s32.totalorder %s163, %s177
      %p179 = scmp.eq.s32.totalorder %s27, 0
      %p180 = por %p178, %p179
      %s182 = sadd.s32 %s181, 1
      %p185 = scmp.eq.s32.totalorder %s21, 1
      %p186 = scmp.ne.s32.totalorder %s181, %s183
      %p187 = scmp.eq.s32.totalorder %s21, 0
      %p188 = por %p186, %p187
      %p189 = scmp.ne.s32.totalorder %s181, %s183
      %p190 = scmp.eq.s32.totalorder %s26, 1
      %p191 = por %p189, %p190
      %p192 = scmp.ne.s32.totalorder %s183, %s184
      %p193 = scmp.eq.s32.totalorder %s26, 0
      %p194 = por %p192, %p193
      %p195 = scmp.ne.s32.totalorder %s183, %s184
      %p196 = scmp.eq.s32.totalorder %s27, 1
      %p197 = por %p195, %p196
      %p199 = scmp.ne.s32.totalorder %s184, %s198
      %p200 = scmp.eq.s32.totalorder %s27, 0
      %p201 = por %p199, %p200
      %s203 = sadd.s32 %s202, 1
      %p206 = scmp.eq.s32.totalorder %s21, 1
      %p207 = scmp.ne.s32.totalorder %s202, %s204
      %p208 = scmp.eq.s32.totalorder %s21, 0
      %p209 = por %p207, %p208
      %p210 = scmp.ne.s32.totalorder %s202, %s204
      %p211 = scmp.eq.s32.totalorder %s26, 1
      %p212 = por %p210, %p211
      %p213 = scmp.ne.s32.totalorder %s204, %s205
      %p214 = scmp.eq.s32.totalorder %s26, 0
      %p215 = por %p213, %p214
      %p216 = scmp.ne.s32.totalorder %s204, %s205
      %p217 = scmp.eq.s32.totalorder %s27, 1
      %p218 = por %p216, %p217
      %p220 = scmp.ne.s32.totalorder %s205, %s219
      %p221 = scmp.eq.s32.totalorder %s27, 0
      %p222 = por %p220, %p221
      %s223 = ssub.s32 %s21, %s28
      %p224 = scmp.eq.s32.totalorder %s223, 0
      %s226 = sadd.s32 %s225, 1
      %s227 = scalar_select %p224, %s225, %s226
      %p230 = pneg %p224
      %p231 = scmp.eq.s32.totalorder %s21, 1
      %p232 = por %p230, %p231
      %p233 = scmp.ne.s32.totalorder %s225, %s228
      %p234 = scmp.eq.s32.totalorder %s21, 0
      %p235 = por %p233, %p234
      %p236 = scmp.ne.s32.totalorder %s225, %s228
      %p237 = scmp.eq.s32.totalorder %s26, 1
      %p238 = por %p236, %p237
      %p239 = scmp.ne.s32.totalorder %s228, %s229
      %p240 = scmp.eq.s32.totalorder %s26, 0
      %p241 = por %p239, %p240
      %p242 = scmp.ne.s32.totalorder %s228, %s229
      %p243 = scmp.eq.s32.totalorder %s27, 1
      %p244 = por %p242, %p243
      %p246 = scmp.ne.s32.totalorder %s229, %s245
      %p247 = scmp.eq.s32.totalorder %s27, 0
      %p248 = por %p246, %p247
      %p249 = scmp.le.s32.totalorder 1, %s21
      %p250 = scmp.lt.s32.totalorder %s21, 3
      %p251 = pnand %p249, %p250
      %p252 = pneg %p251
      // Predicated region
      $region9: #{tpu_custom_call.1} parent=5 // pred_check
        _
      $region10: #{tpu_custom_call.1} parent=5 // pred_check_branch
        %254 = sbr.rel (%p251) target = $region12
      $region11: #{tpu_custom_call.1} parent=5 // pred_region
        %s255 = ssub.s32 %s21, 1
        // Predicated region
        $region13: #{tpu_custom_call.1} parent=11 // pred_check
          %p256 = pneg %p68
        $region14: #{tpu_custom_call.1} parent=11 // pred_check_branch
          %258 = sbr.rel (%p256) target = $region16
        $region15: #{tpu_custom_call.1} parent=11 // pred_region
          _
        $region16: #{tpu_custom_call.1} parent=11 // pred_fallthru
          _
        // Predicated region
        $region17: #{tpu_custom_call.1} parent=11 // pred_check
          %p259 = pneg %p89
        $region18: #{tpu_custom_call.1} parent=11 // pred_check_branch
          %261 = sbr.rel (%p259) target = $region20
        $region19: #{tpu_custom_call.1} parent=11 // pred_region
          _
        $region20: #{tpu_custom_call.1} parent=11 // pred_fallthru
          _
        // Predicated region
        $region21: #{tpu_custom_call.1} parent=11 // pred_check
          %p262 = pneg %p110
        $region22: #{tpu_custom_call.1} parent=11 // pred_check_branch
          %264 = sbr.rel (%p262) target = $region24
        $region23: #{tpu_custom_call.1} parent=11 // pred_region
          _
        $region24: #{tpu_custom_call.1} parent=11 // pred_fallthru
          _
        // Predicated region
        $region25: #{tpu_custom_call.1} parent=11 // pred_check
          %p265 = pneg %p131
        $region26: #{tpu_custom_call.1} parent=11 // pred_check_branch
          %267 = sbr.rel (%p265) target = $region28
        $region27: #{tpu_custom_call.1} parent=11 // pred_region
          _
        $region28: #{tpu_custom_call.1} parent=11 // pred_fallthru
          _
        // Predicated region
        $region29: #{tpu_custom_call.1} parent=11 // pred_check
          %p268 = pneg %p152
        $region30: #{tpu_custom_call.1} parent=11 // pred_check_branch
          %270 = sbr.rel (%p268) target = $region32
        $region31: #{tpu_custom_call.1} parent=11 // pred_region
          _
        $region32: #{tpu_custom_call.1} parent=11 // pred_fallthru
          _
        // Predicated region
        $region33: #{tpu_custom_call.1} parent=11 // pred_check
          %p271 = pneg %p173
        $region34: #{tpu_custom_call.1} parent=11 // pred_check_branch
          %273 = sbr.rel (%p271) target = $region36
        $region35: #{tpu_custom_call.1} parent=11 // pred_region
          _
        $region36: #{tpu_custom_call.1} parent=11 // pred_fallthru
          _
        // Predicated region
        $region37: #{tpu_custom_call.1} parent=11 // pred_check
          %p274 = pneg %p194
        $region38: #{tpu_custom_call.1} parent=11 // pred_check_branch
          %276 = sbr.rel (%p274) target = $region40
        $region39: #{tpu_custom_call.1} parent=11 // pred_region
          _
        $region40: #{tpu_custom_call.1} parent=11 // pred_fallthru
          _
        // Predicated region
        $region41: #{tpu_custom_call.1} parent=11 // pred_check
          %p277 = pneg %p215
        $region42: #{tpu_custom_call.1} parent=11 // pred_check_branch
          %279 = sbr.rel (%p277) target = $region44
        $region43: #{tpu_custom_call.1} parent=11 // pred_region
          _
        $region44: #{tpu_custom_call.1} parent=11 // pred_fallthru
          _
      $region12: #{tpu_custom_call.1} parent=5 // pred_fallthru
        _
      %p280 = scmp.lt.s32.totalorder %s21, 2
      // Predicated region
      $region45: #{tpu_custom_call.1} parent=5 // pred_check
        %p281 = pneg %p280
      $region46: #{tpu_custom_call.1} parent=5 // pred_check_branch
        %283 = sbr.rel (%p281) target = $region48
      $region47: #{tpu_custom_call.1} parent=5 // pred_region
        // Predicated region
        $region49: #{tpu_custom_call.1} parent=47 // pred_check
          %p284 = pneg %p41
        $region50: #{tpu_custom_call.1} parent=47 // pred_check_branch
          %286 = sbr.rel (%p284) target = $region52
        $region51: #{tpu_custom_call.1} parent=47 // pred_region
          %s287 = sand.u32 %s31, 1
          %s288 = scalar_lea.sflag [#allocation5], %s287
          %s289 = sand.u32 %s31, 1
          %s290 = smul.addr %s289, 8
          %s291 = scalar_lea.vmem [#allocation4], %s290
          %s293 = ssub.s32 128, 128
          %294 = vsyncadd %s288, %s293
          %s295 = smul.addr %s21, 2
          %s296 = smul.addr %s295, 64
          %s297 = scalar_lea.hbm %s0, %s296
          %s299 = sshll.u32 %s291, 4
          %s300 = int_to_ptr.vmem [resolvable:$true] %s299
          %302 = dma.hbm_to_vmem [thread:$0]  %s297, 128, %s300, %s288
        $region52: #{tpu_custom_call.1} parent=47 // pred_fallthru
          _
      $region48: #{tpu_custom_call.1} parent=5 // pred_fallthru
        _
      %p303 = scmp.le.s32.totalorder 1, %s21
      %p304 = scmp.lt.s32.totalorder %s21, 3
      %p305 = pnand %p303, %p304
      %p306 = pneg %p305
      // Predicated region
      $region53: #{tpu_custom_call.1} parent=5 // pred_check
        _
      $region54: #{tpu_custom_call.1} parent=5 // pred_check_branch
        %308 = sbr.rel (%p305) target = $region56
      $region55: #{tpu_custom_call.1} parent=5 // pred_region
        %s309 = ssub.s32 %s21, 1
        %s310 = sand.u32 %s34, 1
        %s311 = scalar_lea.sflag [#allocation5], %s310
        %s312 = sand.u32 %s34, 1
        %s313 = smul.addr %s312, 8
        %s314 = scalar_lea.vmem [#allocation4], %s313
        // Predicated region
        $region57: #{tpu_custom_call.1} parent=55 // pred_check
          %p315 = pneg %p47
        $region58: #{tpu_custom_call.1} parent=55 // pred_check_branch
          %317 = sbr.rel (%p315) target = $region60
        $region59: #{tpu_custom_call.1} parent=55 // pred_region
          %318 = dma.done %s311, 128
        $region60: #{tpu_custom_call.1} parent=55 // pred_fallthru
          _
        %s319 = sand.u32 %s34, 1
        %s320 = scalar_lea.sflag [#allocation5], %s319
        %s321 = sand.u32 %s34, 1
        %s322 = smul.addr %s321, 8
        %s323 = scalar_lea.vmem [#allocation4], %s322
        %p324 = pneg %p47
        %p325 = pneg %p44
        %p326 = pneg %p68
        %p327 = pneg %p65
        %p328 = pneg %p89
        %p329 = pneg %p86
        %p330 = pneg %p110
        %p331 = pneg %p107
        %p332 = pneg %p131
        %p333 = pneg %p128
        %p334 = pneg %p152
        %p335 = pneg %p149
        %p336 = pneg %p173
        %p337 = pneg %p170
        %p338 = pneg %p194
        %p339 = pneg %p191
        %p340 = pneg %p215
        %p341 = pneg %p212
        %p342 = pneg %p241
        %p343 = pneg %p238
        %s344 = sand.u32 %s228, 1
        %s345 = scalar_lea.sflag [#allocation6], %s344
        %s346 = sand.u32 %s228, 1
        %s347 = smul.addr %s346, 8
        %s348 = scalar_lea.vmem [#allocation7], %s347
        %v350 = vlaneseq
        %v351 = vand.u32 %v350, 127
        %v352 = vadd.s32 %v351, 128
        %vm353 = vcmp.lt.s32.totalorder %v351, 0
        %v354 = vsub.s32 0, %v351
        %v355 = vsel %vm353, %v354, %v351
        %v356 = vshrl.u32 %v355, 4
        %v357 = vand.u32 %v355, 15
        %v358 = vsub.s32 0, %v357
        %v359 = vsel %vm353, %v358, %v357
        %vm360 = vcmp.lt.s32.totalorder %v352, 0
        %v361 = vsub.s32 0, %v352
        %v362 = vsel %vm360, %v361, %v352
        %v363 = vshrl.u32 %v362, 4
        %v364 = vand.u32 %v362, 15
        %v365 = vsub.s32 0, %v364
        %v366 = vsel %vm360, %v365, %v364
        %vm367 = vcmp.ne.s32.totalorder %v359, 0
        %vm368 = vcmp.ne.s32.totalorder %v366, 0
        %vm369 = vcmp.lt.s32.totalorder %v359, 0
        %vm370 = vcmp.lt.s32.totalorder %v366, 0
        %vm371 = vmand %vm369, %vm367
        %vm372 = vmand %vm370, %vm368
        %v373 = vadd.s32 %v359, 16
        %v374 = vadd.s32 %v366, 16
        %v375 = vsel %vm371, %v373, %v359
        %v376 = vsel %vm372, %v374, %v366
        %v377 = vadd.s32 %v375, 4294967295
        %v378 = vadd.s32 %v376, 4294967295
        %vm379 = vcmp.ge.s32.totalorder %v377, 0
        %vm380 = vcmp.ge.s32.totalorder %v378, 0
        %vm381 = vcmp.lt.s32.totalorder %v377, 16
        %vm382 = vcmp.lt.s32.totalorder %v378, 16
        %vm383 = vmand %vm379, %vm381
        %vm384 = vmand %vm380, %vm382
        %v385 = vsel %vm383, 1, 0
        %v386 = vsel %vm384, 1, 0
        %v387 = vcvt.s32.f32 %v385
        %v388 = vcvt.s32.f32 %v386
        %v389 = vadd.s32 %v375, 1
        %v390 = vadd.s32 %v376, 1
        %vm391 = vcmp.ge.s32.totalorder %v389, 0
        %vm392 = vcmp.ge.s32.totalorder %v390, 0
        %vm393 = vcmp.lt.s32.totalorder %v389, 16
        %vm394 = vcmp.lt.s32.totalorder %v390, 16
        %vm395 = vmand %vm391, %vm393
        %vm396 = vmand %vm392, %vm394
        %v397 = vsel %vm395, 1, 0
        %v398 = vsel %vm396, 1, 0
        %v399 = vcvt.s32.f32 %v397
        %v400 = vcvt.s32.f32 %v398
        %401 = vst [vmem:[#allocation2] sm:$0xff] 0.0
        %402 = vst [vmem:[#allocation2 + $0x8] sm:$0xff] 0.0
        %403 = vst [vmem:[#allocation3] sm:$0xff] 0
        %404 = vst [vmem:[#allocation3 + $0x8] sm:$0xff] 0
        %405 = vst [vmem:[#allocation3 + $0x10] sm:$0xff] 0
        %406 = vst [vmem:[#allocation3 + $0x18] sm:$0xff] 0
        %407 = vst [vmem:[#allocation3 + $0x20] sm:$0xff] 0
        %408 = vst [vmem:[#allocation3 + $0x28] sm:$0xff] 0
        %409 = vst [vmem:[#allocation3 + $0x30] sm:$0xff] 0
        %410 = vst [vmem:[#allocation3 + $0x38] sm:$0xff] 0
        %411 = vst [vmem:[#allocation3 + $0x40] sm:$0xff] 0
        %v412 = vld [vmem:[%s314] sm:$0xff]
        %v414 = vcombine.high %v412, %v412
        %416 = vrot.lane.b32.xlu0 %v412, 16
        %v417 = vpop.permute.xlu0 %416
        %418 = vrot.lane.b32.xlu0 %v414, 16
        %v419 = vpop.permute.xlu0 %418
        %vm420 = vcmp.lt.s32.totalorder %v351, 16
        %v421 = vsel %vm420, %v417, %v419
        %v422 = vsel %vm420, %v419, %v417
        %v425 = vcombine.low %v422, %v421
        %v427 = vadd.f32 %v412, %v425
        %v429 = vcombine.high %v427, %v427
        %431 = vrot.lane.b32.xlu0 %v427, 32
        %v432 = vpop.permute.xlu0 %431
        %433 = vrot.lane.b32.xlu0 %v429, 32
        %v434 = vpop.permute.xlu0 %433
        %vm435 = vcmp.lt.s32.totalorder %v351, 32
        %v436 = vsel %vm435, %v432, %v434
        %v437 = vsel %vm435, %v434, %v432
        %v440 = vcombine.low %v437, %v436
        %v442 = vadd.f32 %v427, %v440
        %v444 = vcombine.high %v442, %v442
        %446 = vrot.lane.b32.xlu0 %v442, 64
        %v447 = vpop.permute.xlu0 %446
        %448 = vrot.lane.b32.xlu0 %v444, 64
        %v449 = vpop.permute.xlu0 %448
        %vm450 = vcmp.lt.s32.totalorder %v351, 64
        %v451 = vsel %vm450, %v447, %v449
        %v452 = vsel %vm450, %v449, %v447
        %v455 = vcombine.low %v452, %v451
        %v457 = vadd.f32 %v442, %v455
        %v459 = vcombine.high %v457, %v457
        %v460 = vcombine.low %v459, %v457
        %v462 = vadd.f32 %v457, %v460
        %v463 = vmul.f32 %v462, 0.0625
        %v464 = vsub.f32 %v412, %v463
        %v465 = vmul.f32 %v464, %v464
        %v467 = vcombine.high %v465, %v465
        %469 = vrot.lane.b32.xlu0 %v465, 16
        %v470 = vpop.permute.xlu0 %469
        %471 = vrot.lane.b32.xlu0 %v467, 16
        %v472 = vpop.permute.xlu0 %471
        %v473 = vsel %vm420, %v470, %v472
        %v474 = vsel %vm420, %v472, %v470
        %v477 = vcombine.low %v474, %v473
        %v479 = vadd.f32 %v465, %v477
        %v481 = vcombine.high %v479, %v479
        %483 = vrot.lane.b32.xlu0 %v479, 32
        %v484 = vpop.permute.xlu0 %483
        %485 = vrot.lane.b32.xlu0 %v481, 32
        %v486 = vpop.permute.xlu0 %485
        %v487 = vsel %vm435, %v484, %v486
        %v488 = vsel %vm435, %v486, %v484
        %v491 = vcombine.low %v488, %v487
        %v493 = vadd.f32 %v479, %v491
        %v495 = vcombine.high %v493, %v493
        %497 = vrot.lane.b32.xlu0 %v493, 64
        %v498 = vpop.permute.xlu0 %497
        %499 = vrot.lane.b32.xlu0 %v495, 64
        %v500 = vpop.permute.xlu0 %499
        %v501 = vsel %vm450, %v498, %v500
        %v502 = vsel %vm450, %v500, %v498
        %v505 = vcombine.low %v502, %v501
        %v507 = vadd.f32 %v493, %v505
        %v509 = vcombine.high %v507, %v507
        %v510 = vcombine.low %v509, %v507
        %v512 = vadd.f32 %v507, %v510
        %v513 = vmul.f32 %v512, 0.0625
        %v514 = vadd.f32 %v513, 1e-05
        %v515 = vrsqrt.pop %v514
        %v516 = vmul.f32 %v464, %v515
        %v517 = vld [vmem:[%s1] sm:$0x3]
        %v519 = vlaneseq
        %v520 = vshrl.u32 %v519, 7
        %v521 = vsub.s32 0, %v520
        %v522 = vrot.slane %v517, %v521
        %v523 = vlaneseq
        %v524 = vshrl.u32 %v523, 7
        %v525 = vsub.s32 1, %v524
        %v526 = vrot.slane %v517, %v525
        %v527 = vcombine.low %v522, %v526
        %v529 = vmul.f32 %v516, %v527
        %v530 = vld [vmem:[%s2] sm:$0x3]
        %v532 = vlaneseq
        %v533 = vshrl.u32 %v532, 7
        %v534 = vsub.s32 0, %v533
        %v535 = vrot.slane %v530, %v534
        %v536 = vlaneseq
        %v537 = vshrl.u32 %v536, 7
        %v538 = vsub.s32 1, %v537
        %v539 = vrot.slane %v530, %v538
        %v540 = vcombine.low %v535, %v539
        %v542 = vadd.f32 %v529, %v540
        %v543 = vmax.f32 %v542, 0.0
        %544 = vst [vmem:[#allocation2 + $0x4] sm:$0xff] %v543
        %v545 = vld [vmem:[#allocation2] sm:$0xff]
        %v546 = vld [vmem:[#allocation2 + $0x8] sm:$0xf]
        %v549 = vcombine.low %v387, %v388
        %550 = vrot.lane.b32.xlu0 %v549, 111
        %v551 = vpop.permute.xlu0 %550
        %v552 = vrot.slane %v551, 4
        %vm553 = vcmask 908288
        %v554 = vsel %vm553, %v552, %v551
        %v557 = vmul.f32 %v545, %v554
        %v558 = vmul.f32 %v546, %v552
        %v560 = vcombine.high %v557, %v557
        %v562 = vpack.c.bf16 %v557, %v557
        %v563 = vpack.c.bf16 %v560, %v560
        %v564 = vpack.c.bf16 %v558, %v558
        %v568 = vunpack.c.l.b16 %v562
        %v569 = vunpack.c.l.b16 %v563
        %v570 = vunpack.c.l.b16 %v564
        %v571 = vpack.c.b16 %v569, %v568
        %v572 = vpack.c.b16 %v570, %v570
        %573 = vrot.lane.b32.xlu0 %v571, 17
        %v574 = vpop.permute.xlu0 %573
        %575 = vrot.lane.b32.xlu0 %v572, 17
        %v576 = vpop.permute.xlu0 %575
        %v577 = vrot.slane %v574, 4
        %v578 = vrot.slane %v576, 4
        %vm579 = vcmask 1043456
        %v580 = vsel %vm579, %v577, %v578
        %vm581 = vcmask 138240
        %v582 = vsel %vm581, %v574, %v580
        %584 = vst [vmem:[#allocation3] sm:$0x33] %v582
        %v585 = vld [vmem:[#allocation2] sm:$0xff]
        %v586 = vld [vmem:[#allocation2 + $0x8] sm:$0xf]
        %v588 = vcombine.high %v585, %v585
        %v590 = vpack.c.bf16 %v585, %v585
        %v591 = vpack.c.bf16 %v588, %v588
        %v592 = vpack.c.bf16 %v586, %v586
        %v596 = vunpack.c.l.b16 %v590
        %v597 = vunpack.c.l.b16 %v591
        %v598 = vunpack.c.l.b16 %v592
        %v599 = vpack.c.b16 %v597, %v596
        %v600 = vpack.c.b16 %v598, %v598
        %601 = vrot.lane.b32.xlu0 %v599, 16
        %v602 = vpop.permute.xlu0 %601
        %603 = vrot.lane.b32.xlu0 %v600, 16
        %v604 = vpop.permute.xlu0 %603
        %v605 = vrot.slane %v602, 4
        %v606 = vrot.slane %v604, 4
        %v607 = vsel %vm579, %v605, %v606
        %vm608 = vcmask 130048
        %v609 = vsel %vm608, %v602, %v607
        %611 = vst [vmem:[#allocation3 + $0x8] sm:$0x33] %v609
        %v612 = vld [vmem:[#allocation2] sm:$0xff]
        %v613 = vld [vmem:[#allocation2 + $0x8] sm:$0xf]
        %v616 = vcombine.low %v399, %v400
        %617 = vrot.lane.b32.xlu0 %v616, 113
        %v618 = vpop.permute.xlu0 %617
        %v619 = vrot.slane %v618, 4
        %vm620 = vcmask 924672
        %v621 = vsel %vm620, %v619, %v618
        %v624 = vmul.f32 %v612, %v621
        %v625 = vmul.f32 %v613, %v619
        %v627 = vcombine.high %v624, %v624
        %v629 = vpack.c.bf16 %v624, %v624
        %v630 = vpack.c.bf16 %v627, %v627
        %v631 = vpack.c.bf16 %v625, %v625
        %v635 = vunpack.c.l.b16 %v629
        %v636 = vunpack.c.l.b16 %v630
        %v637 = vunpack.c.l.b16 %v631
        %v638 = vpack.c.b16 %v636, %v635
        %v639 = vpack.c.b16 %v637, %v637
        %640 = vrot.lane.b32.xlu0 %v638, 15
        %v641 = vpop.permute.xlu0 %640
        %642 = vrot.lane.b32.xlu0 %v639, 15
        %v643 = vpop.permute.xlu0 %642
        %v644 = vrot.slane %v641, 4
        %v645 = vrot.slane %v643, 4
        %v646 = vsel %vm579, %v644, %v645
        %vm647 = vcmask 121856
        %v648 = vsel %vm647, %v641, %v646
        %650 = vst [vmem:[#allocation3 + $0x10] sm:$0x33] %v648
        %v651 = vld [vmem:[#allocation2] sm:$0xff]
        %v652 = vld [vmem:[#allocation2 + $0x8] sm:$0xf]
        %653 = vrot.lane.b32.xlu0 %v549, 127
        %v654 = vpop.permute.xlu0 %653
        %v655 = vrot.slane %v654, 4
        %vm656 = vcmask 1039360
        %v657 = vsel %vm656, %v655, %v654
        %v660 = vmul.f32 %v651, %v657
        %v661 = vmul.f32 %v652, %v655
        %v663 = vcombine.high %v660, %v660
        %v665 = vpack.c.bf16 %v660, %v660
        %v666 = vpack.c.bf16 %v663, %v663
        %v667 = vpack.c.bf16 %v661, %v661
        %v671 = vunpack.c.l.b16 %v665
        %v672 = vunpack.c.l.b16 %v666
        %v673 = vunpack.c.l.b16 %v667
        %v674 = vpack.c.b16 %v672, %v671
        %v675 = vpack.c.b16 %v673, %v673
        %676 = vrot.lane.b32.xlu0 %v674, 1
        %v677 = vpop.permute.xlu0 %676
        %678 = vrot.lane.b32.xlu0 %v675, 1
        %v679 = vpop.permute.xlu0 %678
        %v680 = vrot.slane %v677, 4
        %v681 = vrot.slane %v679, 4
        %v682 = vsel %vm579, %v680, %v681
        %vm683 = vcmask 7168
        %v684 = vsel %vm683, %v677, %v682
        %686 = vst [vmem:[#allocation3 + $0x18] sm:$0x33] %v684
        %v687 = vld [vmem:[#allocation2 + $0x4] sm:$0xff]
        %v689 = vcombine.high %v687, %v687
        %v691 = vpack.c.bf16 %v687, %v687
        %v692 = vpack.c.bf16 %v689, %v689
        %v695 = vunpack.c.l.b16 %v691
        %v696 = vunpack.c.l.b16 %v692
        %v697 = vpack.c.b16 %v696, %v695
        %699 = vst [vmem:[#allocation3 + $0x20] sm:$0x33] %v697
        %v700 = vld [vmem:[#allocation2 + $0x4] sm:$0xff]
        %v701 = vld [vmem:[#allocation2 + $0xc] sm:$0xf]
        %702 = vrot.lane.b32.xlu0 %v616, 1
        %v703 = vpop.permute.xlu0 %702
        %v704 = vrot.slane %v703, 4
        %vm705 = vcmask 7168
        %v706 = vsel %vm705, %v704, %v703
        %v709 = vmul.f32 %v700, %v706
        %v710 = vmul.f32 %v701, %v704
        %v712 = vcombine.high %v709, %v709
        %v714 = vpack.c.bf16 %v709, %v709
        %v715 = vpack.c.bf16 %v712, %v712
        %v716 = vpack.c.bf16 %v710, %v710
        %v720 = vunpack.c.l.b16 %v714
        %v721 = vunpack.c.l.b16 %v715
        %v722 = vunpack.c.l.b16 %v716
        %v723 = vpack.c.b16 %v721, %v720
        %v724 = vpack.c.b16 %v722, %v722
        %725 = vrot.lane.b32.xlu0 %v723, 127
        %v726 = vpop.permute.xlu0 %725
        %727 = vrot.lane.b32.xlu0 %v724, 127
        %v728 = vpop.permute.xlu0 %727
        %v729 = vrot.slane %v726, 4
        %v730 = vrot.slane %v728, 4
        %v731 = vsel %vm579, %v729, %v730
        %vm732 = vcmask 1039360
        %v733 = vsel %vm732, %v726, %v731
        %735 = vst [vmem:[#allocation3 + $0x28] sm:$0x33] %v733
        %v736 = vld [vmem:[#allocation2 + $0x4] sm:$0xff]
        %v737 = vld [vmem:[#allocation2 + $0xc] sm:$0xf]
        %738 = vrot.lane.b32.xlu0 %v549, 15
        %v739 = vpop.permute.xlu0 %738
        %v740 = vrot.slane %v739, 4
        %vm741 = vcmask 121856
        %v742 = vsel %vm741, %v740, %v739
        %v745 = vmul.f32 %v736, %v742
        %v746 = vmul.f32 %v737, %v740
        %v748 = vcombine.high %v745, %v745
        %v750 = vpack.c.bf16 %v745, %v745
        %v751 = vpack.c.bf16 %v748, %v748
        %v752 = vpack.c.bf16 %v746, %v746
        %v756 = vunpack.c.l.b16 %v750
        %v757 = vunpack.c.l.b16 %v751
        %v758 = vunpack.c.l.b16 %v752
        %v759 = vpack.c.b16 %v757, %v756
        %v760 = vpack.c.b16 %v758, %v758
        %761 = vrot.lane.b32.xlu0 %v759, 113
        %v762 = vpop.permute.xlu0 %761
        %763 = vrot.lane.b32.xlu0 %v760, 113
        %v764 = vpop.permute.xlu0 %763
        %v765 = vrot.slane %v762, 4
        %v766 = vrot.slane %v764, 4
        %v767 = vsel %vm579, %v765, %v766
        %vm768 = vcmask 924672
        %v769 = vsel %vm768, %v762, %v767
        %771 = vst [vmem:[#allocation3 + $0x30] sm:$0x33] %v769
        %v772 = vld [vmem:[#allocation2 + $0x4] sm:$0xff]
        %v773 = vld [vmem:[#allocation2 + $0xc] sm:$0xf]
        %v775 = vcombine.high %v772, %v772
        %v777 = vpack.c.bf16 %v772, %v772
        %v778 = vpack.c.bf16 %v775, %v775
        %v779 = vpack.c.bf16 %v773, %v773
        %v783 = vunpack.c.l.b16 %v777
        %v784 = vunpack.c.l.b16 %v778
        %v785 = vunpack.c.l.b16 %v779
        %v786 = vpack.c.b16 %v784, %v783
        %v787 = vpack.c.b16 %v785, %v785
        %788 = vrot.lane.b32.xlu0 %v786, 112
        %v789 = vpop.permute.xlu0 %788
        %790 = vrot.lane.b32.xlu0 %v787, 112
        %v791 = vpop.permute.xlu0 %790
        %v792 = vrot.slane %v789, 4
        %v793 = vrot.slane %v791, 4
        %v794 = vsel %vm579, %v792, %v793
        %vm795 = vcmask 916480
        %v796 = vsel %vm795, %v789, %v794
        %798 = vst [vmem:[#allocation3 + $0x38] sm:$0x33] %v796
        %v799 = vld [vmem:[#allocation2 + $0x4] sm:$0xff]
        %v800 = vld [vmem:[#allocation2 + $0xc] sm:$0xf]
        %801 = vrot.lane.b32.xlu0 %v616, 17
        %v802 = vpop.permute.xlu0 %801
        %v803 = vrot.slane %v802, 4
        %vm804 = vcmask 138240
        %v805 = vsel %vm804, %v803, %v802
        %v808 = vmul.f32 %v799, %v805
        %v809 = vmul.f32 %v800, %v803
        %v811 = vcombine.high %v808, %v808
        %v813 = vpack.c.bf16 %v808, %v808
        %v814 = vpack.c.bf16 %v811, %v811
        %v815 = vpack.c.bf16 %v809, %v809
        %v819 = vunpack.c.l.b16 %v813
        %v820 = vunpack.c.l.b16 %v814
        %v821 = vunpack.c.l.b16 %v815
        %v822 = vpack.c.b16 %v820, %v819
        %v823 = vpack.c.b16 %v821, %v821
        %824 = vrot.lane.b32.xlu0 %v822, 111
        %v825 = vpop.permute.xlu0 %824
        %826 = vrot.lane.b32.xlu0 %v823, 111
        %v827 = vpop.permute.xlu0 %826
        %v828 = vrot.slane %v825, 4
        %v829 = vrot.slane %v827, 4
        %v830 = vsel %vm579, %v828, %v829
        %vm831 = vcmask 908288
        %v832 = vsel %vm831, %v825, %v830
        %834 = vst [vmem:[#allocation3 + $0x40] sm:$0x33] %v832
        %v835 = vld [vmem:[%s3] sm:$0x3]
        %v836 = vld [vmem:[#allocation3] sm:$0xff]
        %v837 = vld [vmem:[#allocation3 + $0x8] sm:$0xff]
        %v838 = vld [vmem:[#allocation3 + $0x10] sm:$0xff]
        %v839 = vld [vmem:[#allocation3 + $0x18] sm:$0xff]
        %v840 = vld [vmem:[#allocation3 + $0x20] sm:$0xff]
        %v841 = vld [vmem:[#allocation3 + $0x28] sm:$0xff]
        %v842 = vld [vmem:[#allocation3 + $0x30] sm:$0xff]
        %v843 = vld [vmem:[#allocation3 + $0x38] sm:$0xff]
        %v844 = vld [vmem:[#allocation3 + $0x40] sm:$0xff]
        %v845 = vld [vmem:[%s4] sm:$0xf]
        %847 = vset.pattern.permute.xlu0 0
        %848 = vperm.xlu0 %847, %v845
        %v849 = vpop.permute.xlu0 %848
        %v860 = vunpack.c.l.b16 %v836
        %v861 = vunpack.c.h.b16 %v836
        %v862 = vunpack.c.l.b16 %v837
        %v863 = vunpack.c.h.b16 %v837
        %v864 = vunpack.c.l.b16 %v838
        %v865 = vunpack.c.h.b16 %v838
        %v866 = vunpack.c.l.b16 %v839
        %v867 = vunpack.c.h.b16 %v839
        %v868 = vunpack.c.l.b16 %v840
        %v869 = vunpack.c.h.b16 %v840
        %v870 = vunpack.c.l.b16 %v841
        %v871 = vunpack.c.h.b16 %v841
        %v872 = vunpack.c.l.b16 %v842
        %v873 = vunpack.c.h.b16 %v842
        %v874 = vunpack.c.l.b16 %v843
        %v875 = vunpack.c.h.b16 %v843
        %v876 = vunpack.c.l.b16 %v844
        %v877 = vunpack.c.h.b16 %v844
        %v878 = vpack.c.b16 %v862, %v860
        %v879 = vpack.c.b16 %v863, %v861
        %v880 = vpack.c.b16 %v866, %v864
        %v881 = vpack.c.b16 %v867, %v865
        %v882 = vpack.c.b16 %v870, %v868
        %v883 = vpack.c.b16 %v871, %v869
        %v884 = vpack.c.b16 %v874, %v872
        %v885 = vpack.c.b16 %v875, %v873
        %v886 = vpack.c.b16 %v876, %v876
        %v887 = vpack.c.b16 %v877, %v877
        %vm896 = vcmask 588800
        %v898 = vsel %vm896, %v835, 0
        %vm900 = vcmask 1043456
        %v902 = vsel %vm900, %v886, 0
        %v905 = vsel %vm900, %v887, 0
        %907 = vmatprep.subr.bf16.mxu0 0
        %908 = vmatpush1.bf16.msra.mxu0 0
        %909 = vmatprep.subr.bf16.mxu0 0
        %910 = vmatpush1.bf16.msra.mxu0 0
        %911 = vmatprep.subr.bf16.mxu0 0
        %912 = vmatpush1.bf16.msra.mxu0 0
        %913 = vmatprep.subr.bf16.mxu0 %v905
        %914 = vmatpush1.bf16.msra.mxu0 %v902
        %915 = vmatprep.subr.bf16.mxu0 %v885
        %916 = vmatpush1.bf16.msra.mxu0 %v884
        %917 = vmatprep.subr.bf16.mxu0 %v883
        %918 = vmatpush1.bf16.msra.mxu0 %v882
        %919 = vmatprep.subr.bf16.mxu0 %v881
        %920 = vmatpush1.bf16.msra.mxu0 %v880
        %921 = vmatprep.subr.bf16.mxu0 %v879
        %922 = vmatpush1.bf16.msra.mxu0 %v878
        %923 = vmatprep.subr.bf16.mxu0 0
        %924 = vmatpush2.bf16.msra.mxu0 0
        %925 = vmatprep.subr.bf16.mxu0 0
        %926 = vmatpush2.bf16.msra.mxu0 0
        %927 = vmatprep.subr.bf16.mxu0 0
        %928 = vmatpush2.bf16.msra.mxu0 0
        %929 = vmatprep.subr.bf16.mxu0 0
        %930 = vmatpush2.bf16.msra.mxu0 0
        %931 = vmatprep.subr.bf16.mxu0 0
        %932 = vmatpush2.bf16.msra.mxu0 0
        %933 = vmatprep.subr.bf16.mxu0 0
        %934 = vmatpush2.bf16.msra.mxu0 0
        %935 = vmatprep.subr.bf16.mxu0 0
        %936 = vmatpush2.bf16.msra.mxu0 0
        %937 = vmatprep.subr.bf16.mxu0 0
        %938 = vmatpush2.bf16.msra.mxu0 0
        %939 = vmatprep.mubr.bf16.mxu0 0
        %940 = vmatmul.mubr.bf16.gmra.mxu0 %v898
        %v941 = vpop.f32.mrf.mxu0
        %v942 = vadd.f32 %v849, %v941
        %v943 = vpop.f32.mrf.mxu0
        %v944 = vadd.f32 %v849, %v943
        %v945 = vpop.f32.mrf.mxu0
        %v946 = vpop.f32.mrf.mxu0
        %947 = vdwg.mxu0
        %948 = vrot.lane.b32.xlu0 %v942, 16
        %v949 = vpop.permute.xlu0 %948
        %950 = vrot.lane.b32.xlu0 %v944, 16
        %v951 = vpop.permute.xlu0 %950
        %v952 = vsel %vm420, %v949, %v951
        %v953 = vsel %vm420, %v951, %v949
        %v954 = vadd.f32 %v942, %v953
        %v955 = vadd.f32 %v944, %v952
        %956 = vrot.lane.b32.xlu0 %v954, 32
        %v957 = vpop.permute.xlu0 %956
        %958 = vrot.lane.b32.xlu0 %v955, 32
        %v959 = vpop.permute.xlu0 %958
        %v960 = vsel %vm435, %v957, %v959
        %v961 = vsel %vm435, %v959, %v957
        %v962 = vadd.f32 %v954, %v961
        %v963 = vadd.f32 %v955, %v960
        %964 = vrot.lane.b32.xlu0 %v962, 64
        %v965 = vpop.permute.xlu0 %964
        %966 = vrot.lane.b32.xlu0 %v963, 64
        %v967 = vpop.permute.xlu0 %966
        %v968 = vsel %vm450, %v965, %v967
        %v969 = vsel %vm450, %v967, %v965
        %v970 = vadd.f32 %v962, %v969
        %v971 = vadd.f32 %v963, %v968
        %v972 = vadd.f32 %v970, %v971
        %v973 = vmul.f32 %v972, 0.0625
        %v974 = vsub.f32 %v942, %v973
        %v975 = vsub.f32 %v944, %v973
        %v976 = vmul.f32 %v974, %v974
        %v977 = vmul.f32 %v975, %v975
        %978 = vrot.lane.b32.xlu0 %v976, 16
        %v979 = vpop.permute.xlu0 %978
        %980 = vrot.lane.b32.xlu0 %v977, 16
        %v981 = vpop.permute.xlu0 %980
        %v982 = vsel %vm420, %v979, %v981
        %v983 = vsel %vm420, %v981, %v979
        %v984 = vadd.f32 %v976, %v983
        %v985 = vadd.f32 %v977, %v982
        %986 = vrot.lane.b32.xlu0 %v984, 32
        %v987 = vpop.permute.xlu0 %986
        %988 = vrot.lane.b32.xlu0 %v985, 32
        %v989 = vpop.permute.xlu0 %988
        %v990 = vsel %vm435, %v987, %v989
        %v991 = vsel %vm435, %v989, %v987
        %v992 = vadd.f32 %v984, %v991
        %v993 = vadd.f32 %v985, %v990
        %994 = vrot.lane.b32.xlu0 %v992, 64
        %v995 = vpop.permute.xlu0 %994
        %996 = vrot.lane.b32.xlu0 %v993, 64
        %v997 = vpop.permute.xlu0 %996
        %v998 = vsel %vm450, %v995, %v997
        %v999 = vsel %vm450, %v997, %v995
        %v1000 = vadd.f32 %v992, %v999
        %v1001 = vadd.f32 %v993, %v998
        %v1002 = vadd.f32 %v1000, %v1001
        %v1003 = vmul.f32 %v1002, 0.0625
        %v1004 = vadd.f32 %v1003, 1e-05
        %v1005 = vrsqrt.pop %v1004
        %v1006 = vmul.f32 %v974, %v1005
        %v1007 = vmul.f32 %v975, %v1005
        %v1008 = vld [vmem:[%s5] sm:$0x3]
        %v1010 = vlaneseq
        %v1011 = vshrl.u32 %v1010, 7
        %v1012 = vsub.s32 0, %v1011
        %v1013 = vrot.slane %v1008, %v1012
        %v1014 = vlaneseq
        %v1015 = vshrl.u32 %v1014, 7
        %v1016 = vsub.s32 1, %v1015
        %v1017 = vrot.slane %v1008, %v1016
        %v1020 = vmul.f32 %v1006, %v1013
        %v1021 = vmul.f32 %v1007, %v1017
        %v1022 = vld [vmem:[%s6] sm:$0x3]
        %v1024 = vlaneseq
        %v1025 = vshrl.u32 %v1024, 7
        %v1026 = vsub.s32 0, %v1025
        %v1027 = vrot.slane %v1022, %v1026
        %v1028 = vlaneseq
        %v1029 = vshrl.u32 %v1028, 7
        %v1030 = vsub.s32 1, %v1029
        %v1031 = vrot.slane %v1022, %v1030
        %v1034 = vadd.f32 %v1020, %v1027
        %v1035 = vadd.f32 %v1021, %v1031
        %v1036 = vmax.f32 %v1034, 0.0
        %v1037 = vmax.f32 %v1035, 0.0
        %v1040 = vcombine.low %v1036, %v1037
        %1042 = vst [vmem:[#allocation2 + $0x4] sm:$0xff] %v1040
        %v1043 = vld [vmem:[#allocation2] sm:$0xff]
        %v1044 = vld [vmem:[#allocation2 + $0x8] sm:$0xf]
        %v1045 = vmul.f32 %v1043, %v554
        %v1046 = vmul.f32 %v1044, %v552
        %v1048 = vcombine.high %v1045, %v1045
        %v1050 = vpack.c.bf16 %v1045, %v1045
        %v1051 = vpack.c.bf16 %v1048, %v1048
        %v1052 = vpack.c.bf16 %v1046, %v1046
        %v1056 = vunpack.c.l.b16 %v1050
        %v1057 = vunpack.c.l.b16 %v1051
        %v1058 = vunpack.c.l.b16 %v1052
        %v1059 = vpack.c.b16 %v1057, %v1056
        %v1060 = vpack.c.b16 %v1058, %v1058
        %1061 = vrot.lane.b32.xlu0 %v1059, 17
        %v1062 = vpop.permute.xlu0 %1061
        %1063 = vrot.lane.b32.xlu0 %v1060, 17
        %v1064 = vpop.permute.xlu0 %1063
        %v1065 = vrot.slane %v1062, 4
        %v1066 = vrot.slane %v1064, 4
        %v1067 = vsel %vm579, %v1065, %v1066
        %v1068 = vsel %vm581, %v1062, %v1067
        %1070 = vst [vmem:[#allocation3] sm:$0x33] %v1068
        %v1071 = vld [vmem:[#allocation2] sm:$0xff]
        %v1072 = vld [vmem:[#allocation2 + $0x8] sm:$0xf]
        %v1074 = vcombine.high %v1071, %v1071
        %v1076 = vpack.c.bf16 %v1071, %v1071
        %v1077 = vpack.c.bf16 %v1074, %v1074
        %v1078 = vpack.c.bf16 %v1072, %v1072
        %v1082 = vunpack.c.l.b16 %v1076
        %v1083 = vunpack.c.l.b16 %v1077
        %v1084 = vunpack.c.l.b16 %v1078
        %v1085 = vpack.c.b16 %v1083, %v1082
        %v1086 = vpack.c.b16 %v1084, %v1084
        %1087 = vrot.lane.b32.xlu0 %v1085, 16
        %v1088 = vpop.permute.xlu0 %1087
        %1089 = vrot.lane.b32.xlu0 %v1086, 16
        %v1090 = vpop.permute.xlu0 %1089
        %v1091 = vrot.slane %v1088, 4
        %v1092 = vrot.slane %v1090, 4
        %v1093 = vsel %vm579, %v1091, %v1092
        %v1094 = vsel %vm608, %v1088, %v1093
        %1096 = vst [vmem:[#allocation3 + $0x8] sm:$0x33] %v1094
        %v1097 = vld [vmem:[#allocation2] sm:$0xff]
        %v1098 = vld [vmem:[#allocation2 + $0x8] sm:$0xf]
        %v1099 = vmul.f32 %v1097, %v621
        %v1100 = vmul.f32 %v1098, %v619
        %v1102 = vcombine.high %v1099, %v1099
        %v1104 = vpack.c.bf16 %v1099, %v1099
        %v1105 = vpack.c.bf16 %v1102, %v1102
        %v1106 = vpack.c.bf16 %v1100, %v1100
        %v1110 = vunpack.c.l.b16 %v1104
        %v1111 = vunpack.c.l.b16 %v1105
        %v1112 = vunpack.c.l.b16 %v1106
        %v1113 = vpack.c.b16 %v1111, %v1110
        %v1114 = vpack.c.b16 %v1112, %v1112
        %1115 = vrot.lane.b32.xlu0 %v1113, 15
        %v1116 = vpop.permute.xlu0 %1115
        %1117 = vrot.lane.b32.xlu0 %v1114, 15
        %v1118 = vpop.permute.xlu0 %1117
        %v1119 = vrot.slane %v1116, 4
        %v1120 = vrot.slane %v1118, 4
        %v1121 = vsel %vm579, %v1119, %v1120
        %v1122 = vsel %vm647, %v1116, %v1121
        %1124 = vst [vmem:[#allocation3 + $0x10] sm:$0x33] %v1122
        %v1125 = vld [vmem:[#allocation2] sm:$0xff]
        %v1126 = vld [vmem:[#allocation2 + $0x8] sm:$0xf]
        %v1127 = vmul.f32 %v1125, %v657
        %v1128 = vmul.f32 %v1126, %v655
        %v1130 = vcombine.high %v1127, %v1127
        %v1132 = vpack.c.bf16 %v1127, %v1127
        %v1133 = vpack.c.bf16 %v1130, %v1130
        %v1134 = vpack.c.bf16 %v1128, %v1128
        %v1138 = vunpack.c.l.b16 %v1132
        %v1139 = vunpack.c.l.b16 %v1133
        %v1140 = vunpack.c.l.b16 %v1134
        %v1141 = vpack.c.b16 %v1139, %v1138
        %v1142 = vpack.c.b16 %v1140, %v1140
        %1143 = vrot.lane.b32.xlu0 %v1141, 1
        %v1144 = vpop.permute.xlu0 %1143
        %1145 = vrot.lane.b32.xlu0 %v1142, 1
        %v1146 = vpop.permute.xlu0 %1145
        %v1147 = vrot.slane %v1144, 4
        %v1148 = vrot.slane %v1146, 4
        %v1149 = vsel %vm579, %v1147, %v1148
        %v1150 = vsel %vm683, %v1144, %v1149
        %1152 = vst [vmem:[#allocation3 + $0x18] sm:$0x33] %v1150
        %v1153 = vld [vmem:[#allocation2 + $0x4] sm:$0xff]
        %v1155 = vcombine.high %v1153, %v1153
        %v1157 = vpack.c.bf16 %v1153, %v1153
        %v1158 = vpack.c.bf16 %v1155, %v1155
        %v1161 = vunpack.c.l.b16 %v1157
        %v1162 = vunpack.c.l.b16 %v1158
        %v1163 = vpack.c.b16 %v1162, %v1161
        %1165 = vst [vmem:[#allocation3 + $0x20] sm:$0x33] %v1163
        %v1166 = vld [vmem:[#allocation2 + $0x4] sm:$0xff]
        %v1167 = vld [vmem:[#allocation2 + $0xc] sm:$0xf]
        %v1168 = vmul.f32 %v1166, %v706
        %v1169 = vmul.f32 %v1167, %v704
        %v1171 = vcombine.high %v1168, %v1168
        %v1173 = vpack.c.bf16 %v1168, %v1168
        %v1174 = vpack.c.bf16 %v1171, %v1171
        %v1175 = vpack.c.bf16 %v1169, %v1169
        %v1179 = vunpack.c.l.b16 %v1173
        %v1180 = vunpack.c.l.b16 %v1174
        %v1181 = vunpack.c.l.b16 %v1175
        %v1182 = vpack.c.b16 %v1180, %v1179
        %v1183 = vpack.c.b16 %v1181, %v1181
        %1184 = vrot.lane.b32.xlu0 %v1182, 127
        %v1185 = vpop.permute.xlu0 %1184
        %1186 = vrot.lane.b32.xlu0 %v1183, 127
        %v1187 = vpop.permute.xlu0 %1186
        %v1188 = vrot.slane %v1185, 4
        %v1189 = vrot.slane %v1187, 4
        %v1190 = vsel %vm579, %v1188, %v1189
        %v1191 = vsel %vm732, %v1185, %v1190
        %1193 = vst [vmem:[#allocation3 + $0x28] sm:$0x33] %v1191
        %v1194 = vld [vmem:[#allocation2 + $0x4] sm:$0xff]
        %v1195 = vld [vmem:[#allocation2 + $0xc] sm:$0xf]
        %v1196 = vmul.f32 %v1194, %v742
        %v1197 = vmul.f32 %v1195, %v740
        %v1199 = vcombine.high %v1196, %v1196
        %v1201 = vpack.c.bf16 %v1196, %v1196
        %v1202 = vpack.c.bf16 %v1199, %v1199
        %v1203 = vpack.c.bf16 %v1197, %v1197
        %v1207 = vunpack.c.l.b16 %v1201
        %v1208 = vunpack.c.l.b16 %v1202
        %v1209 = vunpack.c.l.b16 %v1203
        %v1210 = vpack.c.b16 %v1208, %v1207
        %v1211 = vpack.c.b16 %v1209, %v1209
        %1212 = vrot.lane.b32.xlu0 %v1210, 113
        %v1213 = vpop.permute.xlu0 %1212
        %1214 = vrot.lane.b32.xlu0 %v1211, 113
        %v1215 = vpop.permute.xlu0 %1214
        %v1216 = vrot.slane %v1213, 4
        %v1217 = vrot.slane %v1215, 4
        %v1218 = vsel %vm579, %v1216, %v1217
        %v1219 = vsel %vm768, %v1213, %v1218
        %1221 = vst [vmem:[#allocation3 + $0x30] sm:$0x33] %v1219
        %v1222 = vld [vmem:[#allocation2 + $0x4] sm:$0xff]
        %v1223 = vld [vmem:[#allocation2 + $0xc] sm:$0xf]
        %v1225 = vcombine.high %v1222, %v1222
        %v1227 = vpack.c.bf16 %v1222, %v1222
        %v1228 = vpack.c.bf16 %v1225, %v1225
        %v1229 = vpack.c.bf16 %v1223, %v1223
        %v1233 = vunpack.c.l.b16 %v1227
        %v1234 = vunpack.c.l.b16 %v1228
        %v1235 = vunpack.c.l.b16 %v1229
        %v1236 = vpack.c.b16 %v1234, %v1233
        %v1237 = vpack.c.b16 %v1235, %v1235
        %1238 = vrot.lane.b32.xlu0 %v1236, 112
        %v1239 = vpop.permute.xlu0 %1238
        %1240 = vrot.lane.b32.xlu0 %v1237, 112
        %v1241 = vpop.permute.xlu0 %1240
        %v1242 = vrot.slane %v1239, 4
        %v1243 = vrot.slane %v1241, 4
        %v1244 = vsel %vm579, %v1242, %v1243
        %v1245 = vsel %vm795, %v1239, %v1244
        %1247 = vst [vmem:[#allocation3 + $0x38] sm:$0x33] %v1245
        %v1248 = vld [vmem:[#allocation2 + $0x4] sm:$0xff]
        %v1249 = vld [vmem:[#allocation2 + $0xc] sm:$0xf]
        %v1250 = vmul.f32 %v1248, %v805
        %v1251 = vmul.f32 %v1249, %v803
        %v1253 = vcombine.high %v1250, %v1250
        %v1255 = vpack.c.bf16 %v1250, %v1250
        %v1256 = vpack.c.bf16 %v1253, %v1253
        %v1257 = vpack.c.bf16 %v1251, %v1251
        %v1261 = vunpack.c.l.b16 %v1255
        %v1262 = vunpack.c.l.b16 %v1256
        %v1263 = vunpack.c.l.b16 %v1257
        %v1264 = vpack.c.b16 %v1262, %v1261
        %v1265 = vpack.c.b16 %v1263, %v1263
        %1266 = vrot.lane.b32.xlu0 %v1264, 111
        %v1267 = vpop.permute.xlu0 %1266
        %1268 = vrot.lane.b32.xlu0 %v1265, 111
        %v1269 = vpop.permute.xlu0 %1268
        %v1270 = vrot.slane %v1267, 4
        %v1271 = vrot.slane %v1269, 4
        %v1272 = vsel %vm579, %v1270, %v1271
        %v1273 = vsel %vm831, %v1267, %v1272
        %1275 = vst [vmem:[#allocation3 + $0x40] sm:$0x33] %v1273
        %v1276 = vld [vmem:[%s7] sm:$0x3]
        %v1277 = vld [vmem:[#allocation3] sm:$0xff]
        %v1278 = vld [vmem:[#allocation3 + $0x8] sm:$0xff]
        %v1279 = vld [vmem:[#allocation3 + $0x10] sm:$0xff]
        %v1280 = vld [vmem:[#allocation3 + $0x18] sm:$0xff]
        %v1281 = vld [vmem:[#allocation3 + $0x20] sm:$0xff]
        %v1282 = vld [vmem:[#allocation3 + $0x28] sm:$0xff]
        %v1283 = vld [vmem:[#allocation3 + $0x30] sm:$0xff]
        %v1284 = vld [vmem:[#allocation3 + $0x38] sm:$0xff]
        %v1285 = vld [vmem:[#allocation3 + $0x40] sm:$0xff]
        %v1286 = vld [vmem:[%s8] sm:$0xf]
        %1288 = vset.pattern.permute.xlu0 0
        %1289 = vperm.xlu0 %1288, %v1286
        %v1290 = vpop.permute.xlu0 %1289
        %v1301 = vunpack.c.l.b16 %v1277
        %v1302 = vunpack.c.h.b16 %v1277
        %v1303 = vunpack.c.l.b16 %v1278
        %v1304 = vunpack.c.h.b16 %v1278
        %v1305 = vunpack.c.l.b16 %v1279
        %v1306 = vunpack.c.h.b16 %v1279
        %v1307 = vunpack.c.l.b16 %v1280
        %v1308 = vunpack.c.h.b16 %v1280
        %v1309 = vunpack.c.l.b16 %v1281
        %v1310 = vunpack.c.h.b16 %v1281
        %v1311 = vunpack.c.l.b16 %v1282
        %v1312 = vunpack.c.h.b16 %v1282
        %v1313 = vunpack.c.l.b16 %v1283
        %v1314 = vunpack.c.h.b16 %v1283
        %v1315 = vunpack.c.l.b16 %v1284
        %v1316 = vunpack.c.h.b16 %v1284
        %v1317 = vunpack.c.l.b16 %v1285
        %v1318 = vunpack.c.h.b16 %v1285
        %v1319 = vpack.c.b16 %v1303, %v1301
        %v1320 = vpack.c.b16 %v1304, %v1302
        %v1321 = vpack.c.b16 %v1307, %v1305
        %v1322 = vpack.c.b16 %v1308, %v1306
        %v1323 = vpack.c.b16 %v1311, %v1309
        %v1324 = vpack.c.b16 %v1312, %v1310
        %v1325 = vpack.c.b16 %v1315, %v1313
        %v1326 = vpack.c.b16 %v1316, %v1314
        %v1327 = vpack.c.b16 %v1317, %v1317
        %v1328 = vpack.c.b16 %v1318, %v1318
        %v1338 = vsel %vm896, %v1276, 0
        %v1341 = vsel %vm900, %v1327, 0
        %v1344 = vsel %vm900, %v1328, 0
        %1346 = vmatprep.subr.bf16.mxu0 0
        %1347 = vmatpush1.bf16.msra.mxu0 0
        %1348 = vmatprep.subr.bf16.mxu0 0
        %1349 = vmatpush1.bf16.msra.mxu0 0
        %1350 = vmatprep.subr.bf16.mxu0 0
        %1351 = vmatpush1.bf16.msra.mxu0 0
        %1352 = vmatprep.subr.bf16.mxu0 %v1344
        %1353 = vmatpush1.bf16.msra.mxu0 %v1341
        %1354 = vmatprep.subr.bf16.mxu0 %v1326
        %1355 = vmatpush1.bf16.msra.mxu0 %v1325
        %1356 = vmatprep.subr.bf16.mxu0 %v1324
        %1357 = vmatpush1.bf16.msra.mxu0 %v1323
        %1358 = vmatprep.subr.bf16.mxu0 %v1322
        %1359 = vmatpush1.bf16.msra.mxu0 %v1321
        %1360 = vmatprep.subr.bf16.mxu0 %v1320
        %1361 = vmatpush1.bf16.msra.mxu0 %v1319
        %1362 = vmatprep.subr.bf16.mxu0 0
        %1363 = vmatpush2.bf16.msra.mxu0 0
        %1364 = vmatprep.subr.bf16.mxu0 0
        %1365 = vmatpush2.bf16.msra.mxu0 0
        %1366 = vmatprep.subr.bf16.mxu0 0
        %1367 = vmatpush2.bf16.msra.mxu0 0
        %1368 = vmatprep.subr.bf16.mxu0 0
        %1369 = vmatpush2.bf16.msra.mxu0 0
        %1370 = vmatprep.subr.bf16.mxu0 0
        %1371 = vmatpush2.bf16.msra.mxu0 0
        %1372 = vmatprep.subr.bf16.mxu0 0
        %1373 = vmatpush2.bf16.msra.mxu0 0
        %1374 = vmatprep.subr.bf16.mxu0 0
        %1375 = vmatpush2.bf16.msra.mxu0 0
        %1376 = vmatprep.subr.bf16.mxu0 0
        %1377 = vmatpush2.bf16.msra.mxu0 0
        %1378 = vmatprep.mubr.bf16.mxu0 0
        %1379 = vmatmul.mubr.bf16.gmra.mxu0 %v1338
        %v1380 = vpop.f32.mrf.mxu0
        %v1381 = vadd.f32 %v1290, %v1380
        %v1382 = vpop.f32.mrf.mxu0
        %v1383 = vadd.f32 %v1290, %v1382
        %v1384 = vpop.f32.mrf.mxu0
        %v1385 = vpop.f32.mrf.mxu0
        %1386 = vdwg.mxu0
        %v1387 = vadd.f32 %v1381, %v412
        %v1388 = vadd.f32 %v1383, %v414
        %v1391 = vcombine.low %v1387, %v1388
        %1393 = vst [vmem:[%s348] sm:$0xff] %v1391
        %s1394 = sand.u32 %s228, 1
        %s1395 = scalar_lea.sflag [#allocation6], %s1394
        %s1396 = sand.u32 %s228, 1
        %s1397 = smul.addr %s1396, 8
        %s1398 = scalar_lea.vmem [#allocation7], %s1397
        // Predicated region
        $region61: #{tpu_custom_call.1} parent=55 // pred_check
          %p1399 = pneg %p238
        $region62: #{tpu_custom_call.1} parent=55 // pred_check_branch
          %1401 = sbr.rel (%p1399) target = $region64
        $region63: #{tpu_custom_call.1} parent=55 // pred_region
          %s1403 = ssub.s32 128, 128
          %1404 = vsyncadd %s1395, %s1403
          %s1405 = smul.addr %s26, 2
          %s1406 = smul.addr %s1405, 64
          %s1407 = scalar_lea.hbm %s9, %s1406
          %s1409 = sshll.u32 %s1398, 4
          %s1410 = int_to_ptr.vmem [resolvable:$true] %s1409
          %1412 = dma.vmem_to_hbm [thread:$0]  %s1410, 128, %s1407, %s1395
        $region64: #{tpu_custom_call.1} parent=55 // pred_fallthru
          _
      $region56: #{tpu_custom_call.1} parent=5 // pred_fallthru
        _
      %p1413 = scmp.le.s32.totalorder 2, %s21
      // Predicated region
      $region65: #{tpu_custom_call.1} parent=5 // pred_check
        %p1414 = pneg %p1413
      $region66: #{tpu_custom_call.1} parent=5 // pred_check_branch
        %1416 = sbr.rel (%p1414) target = $region68
      $region67: #{tpu_custom_call.1} parent=5 // pred_region
        %s1417 = ssub.s32 %s21, 2
        // Predicated region
        $region69: #{tpu_custom_call.1} parent=67 // pred_check
          %p1418 = pneg %p244
        $region70: #{tpu_custom_call.1} parent=67 // pred_check_branch
          %1420 = sbr.rel (%p1418) target = $region72
        $region71: #{tpu_custom_call.1} parent=67 // pred_region
          %s1421 = sand.u32 %s229, 1
          %s1422 = scalar_lea.sflag [#allocation6], %s1421
          %s1423 = sand.u32 %s229, 1
          %s1424 = smul.addr %s1423, 8
          %s1425 = scalar_lea.vmem [#allocation7], %s1424
          %1426 = dma.done %s1422, 128
        $region72: #{tpu_custom_call.1} parent=67 // pred_fallthru
          _
      $region68: #{tpu_custom_call.1} parent=5 // pred_fallthru
        _
    $region6: #{tpu_custom_call.1} parent=1 // loop_footer
      %s25 = sadd.s32 1, %s21
    $region7: #{tpu_custom_call.1} parent=1 // loop_footer_branch
      %20 = sbr.rel target = $region3
    $region8: #{tpu_custom_call.1} parent=1 // loop_exit
      _
    %1427 = vsyncpa [#allocation5], 1
    %s1428 = scalar_lea.sflag [#allocation5], 1
    %1429 = vsyncpa %s1428, 1
    %1430 = vsyncpa [#allocation6], 1
    %s1431 = scalar_lea.sflag [#allocation6], 1
    %1432 = vsyncpa %s1431, 1

</llo_original>
